<compile_context>
chip_gen: v7x
topology: tpu7x:2x2x1
jax: 0.10.0
libtpu: 0.0.40
codegen_flags: <defaults>
</compile_context>

<pallas_src>
import numpy as np
import jax
import jax.numpy as jnp
from jax import lax
from jax.experimental import pallas as pl
from jax.experimental.pallas import tpu as pltpu


# ----------------------------------------------------------------------------
# Pallas kernel: backbone (2 conv-as-matmul + ReLU) + the two critic heads
# fused into a single stacked/block-diagonal MLP chain.
# ----------------------------------------------------------------------------
def _critic_kernel(state_ref, action_ref,
                   m1_ref, b1v_ref, m2_ref, b2v_ref,
                   w1f_ref, w1a_ref, b1_ref, w2_ref, b2_ref, w3_ref, b3_ref,
                   q_ref):
    bf16 = jnp.bfloat16
    s = state_ref[...]                                    # (TB, L)   f32
    a = action_ref[...]                                   # (TB, A)   f32

    # --- TinyLidarBackbone: conv1 -> ReLU -> conv2 -> ReLU -> flatten -------
    # Convs expressed as dense Toeplitz matmuls; bf16 x bf16 operands on the
    # MXU, f32 accumulation, f32 elementwise chain.
    h1 = jnp.dot(s.astype(bf16), m1_ref[...],
                 preferred_element_type=jnp.float32) + b1v_ref[...]
    h1 = jnp.maximum(h1, 0.0)                             # (TB, 16*L1) f32

    feat = jnp.dot(h1.astype(bf16), m2_ref[...],
                   preferred_element_type=jnp.float32) + b2v_ref[...]
    feat = jnp.maximum(feat, 0.0)                         # (TB, F) f32

    # --- Fused critic1+critic2, layer 1 --------------------------------------
    # The [features, action] concat is folded into split weights: the feature
    # term is an MXU dot; the tiny K=A action term is VPU broadcast FMAs
    # (an MXU push with contraction depth 4 would be >96% zero padding).
    z = jnp.dot(feat.astype(bf16), w1f_ref[...],
                preferred_element_type=jnp.float32) + b1_ref[...]
    w1a = w1a_ref[...]                                    # (A, 2H) f32
    for j in range(w1a_ref.shape[0]):                     # static unroll, A small
        z = z + a[:, j:j + 1] * w1a[j:j + 1, :]
    z = jnp.maximum(z, 0.0)                               # (TB, 2H) f32

    # --- Layer 2 (block-diagonal stacked heads) ------------------------------
    z = jnp.dot(z.astype(bf16), w2_ref[...],
                preferred_element_type=jnp.float32) + b2_ref[...]
    z = jnp.maximum(z, 0.0)                               # (TB, 2H) f32

    # --- Layer 3 (2H -> 2) on VPU + XLU ---------------------------------------
    # An MXU push whose result occupies 2 lanes is nearly empty; do a VPU
    # multiply by the stacked w3 row and two lane reductions instead.
    h = w3_ref.shape[1] // 2
    prod = z * w3_ref[...]                                # (TB, 2H)
    q1 = jnp.sum(prod[:, :h], axis=-1, keepdims=True)     # (TB, 1)
    q2 = jnp.sum(prod[:, h:], axis=-1, keepdims=True)     # (TB, 1)
    q_ref[...] = jnp.concatenate([q1, q2], axis=-1) + b3_ref[...]


# ----------------------------------------------------------------------------
# Hardware-aware helpers.
# ----------------------------------------------------------------------------
def _tensorcores_per_chip():
    """Heuristic: v7x has 2 TensorCores/chip that the 'parallel' grid axis can
    shard across; v5e/v6e have 1."""
    try:
        kind = jax.devices()[0].device_kind.lower()
    except Exception:
        return 1
    return 2 if "7" in kind else 1


def _vmem_capacity_bytes():
    try:
        return int(pltpu.get_tpu_info().vmem_capacity_bytes)
    except Exception:
        return 64 << 20  # conservative (v7x per-core VMEM)


def _pick_batch_tile(batch, min_grid_steps):
    """Largest MXU-friendly batch tile that evenly divides the batch while
    leaving at least `min_grid_steps` grid steps (so v7x's 2nd core gets work)."""
    for tb in (512, 256, 128, 64, 32, 16, 8):
        if batch % tb == 0 and batch // tb >= min_grid_steps:
            return tb
    return batch  # tiny / awkward batch: single full block (allowed by Pallas)


# ----------------------------------------------------------------------------
# Fused forward wrapper.
# ----------------------------------------------------------------------------
def double_conv_critic_forward(state, action, kparams):
    """Fused Pallas forward.  Returns (q1, q2) with shapes (B, 1) each."""
    B, L = state.shape
    A = action.shape[1]
    TB = _pick_batch_tile(B, min_grid_steps=_tensorcores_per_chip())
    nb = B // TB

    weights = (kparams["m1"], kparams["b1v"], kparams["m2"], kparams["b2v"],
               kparams["w1f"], kparams["w1a"], kparams["b1"],
               kparams["w2"], kparams["b2"], kparams["w3"], kparams["b3"])

    # Advisory cost estimate for XLA scheduling around the custom call.
    c1l1 = kparams["m1"].shape[1]
    Fd = kparams["m2"].shape[1]
    H2 = kparams["w2"].shape[1]
    flops = int(2 * B * (L * c1l1 + c1l1 * Fd + Fd * H2 + A * H2 + H2 * H2 + H2))
    weight_bytes = sum(int(np.prod(w.shape)) * w.dtype.itemsize for w in weights)
    io_bytes = int(weight_bytes + B * (L + A + 2) * 4)

    # Scoped-VMEM limit: weights counted once (single-buffered), batch tiles
    # double-buffered, plus intermediate/activation headroom.  Capped at ~2/3
    # of this generation's physical VMEM.
    act_tile_bytes = TB * (L + A + 2) * 4
    interm_bytes = TB * (c1l1 + Fd + 2 * H2) * 4
    need = weight_bytes + 2 * act_tile_bytes + interm_bytes + (2 << 20)
    vmem_limit = int(min(max(need, 16 << 20), (_vmem_capacity_bytes() * 2) // 3))

    def run(single_buffer_weights):
        def batch_spec(cols):
            return pl.BlockSpec((TB, cols), lambda i: (i, 0))

        def weight_spec(arr):
            if single_buffer_weights:
                # Weights never change block index -> a second buffer is waste.
                return pl.BlockSpec(arr.shape, lambda i: (0, 0),
                                    pipeline_mode=pl.Buffered(1))
            return pl.BlockSpec(arr.shape, lambda i: (0, 0))

        in_specs = ([batch_spec(L), batch_spec(A)]
                    + [weight_spec(w) for w in weights])
        return pl.pallas_call(
            _critic_kernel,
            grid=(nb,),
            in_specs=in_specs,
            out_specs=batch_spec(2),
            out_shape=jax.ShapeDtypeStruct((B, 2), jnp.float32),
            compiler_params=pltpu.CompilerParams(
                dimension_semantics=("parallel",),
                vmem_limit_bytes=vmem_limit),
            cost_estimate=pl.CostEstimate(flops=flops, transcendentals=0,
                                          bytes_accessed=io_bytes),
        )(state, action, *weights)

    try:
        q = run(True)
    except Exception:
        # TODO(synk): pipeline_mode=pl.Buffered(1) unsupported on this JAX
        # version -- fall back to default double-buffered weight specs.
        q = run(False)

    return q[:, 0:1], q[:, 1:2]


# ----------------------------------------------------------------------------
# Parameter setup (glue): deterministic init + conv -> Toeplitz-matmul rewrite
# + head fusion + bf16 storage for the MXU-side weights.
# ----------------------------------------------------------------------------
def _conv1d_to_matrix(w, b, lin, stride, pad):
    """Rewrite Conv1d(w:(Cout,Cin,K), b:(Cout,)) on length-`lin` input as a
    dense matmul on channel-major-flattened vectors.
    Returns M:(Cin*lin, Cout*lout), bvec:(Cout*lout,), lout."""
    w = np.asarray(w, dtype=np.float32)
    b = np.asarray(b, dtype=np.float32)
    cout, cin, k = w.shape
    lout = (lin + 2 * pad - k) // stride + 1
    M = np.zeros((cin * lin, cout * lout), dtype=np.float32)
    for co in range(cout):
        for t in range(lout):
            for ci in range(cin):
                for kk in range(k):
                    s = stride * t - pad + kk
                    if 0 <= s < lin:
                        M[ci * lin + s, co * lout + t] = w[co, ci, kk]
    bvec = np.repeat(b, lout)
    return M, bvec, lout


def _uniform(key, shape, fan_in):
    bound = 1.0 / np.sqrt(fan_in)
    return jax.random.uniform(key, shape, jnp.float32, -bound, bound)


def init_params(key, state_dim, action_dim, hidden_dim):
    """Deterministic synthetic parameters (PyTorch-default-style uniform)."""
    keys = jax.random.split(key, 20)
    ki = iter(keys)

    w_conv1 = _uniform(next(ki), (16, 1, 5), 1 * 5)
    b_conv1 = _uniform(next(ki), (16,), 1 * 5)
    w_conv2 = _uniform(next(ki), (32, 16, 3), 16 * 3)
    b_conv2 = _uniform(next(ki), (32,), 16 * 3)

    l1 = (state_dim + 2 * 2 - 5) // 2 + 1
    l2 = (l1 + 2 * 1 - 3) // 2 + 1
    out_dim = 32 * l2
    in_dim = out_dim + action_dim

    def make_head():
        w1 = _uniform(next(ki), (in_dim, hidden_dim), in_dim)
        b1 = _uniform(next(ki), (hidden_dim,), in_dim)
        w2 = _uniform(next(ki), (hidden_dim, hidden_dim), hidden_dim)
        b2 = _uniform(next(ki), (hidden_dim,), hidden_dim)
        w3 = _uniform(next(ki), (hidden_dim, 1), hidden_dim)
        b3 = _uniform(next(ki), (1,), hidden_dim)
        return dict(w1=w1, b1=b1, w2=w2, b2=b2, w3=w3, b3=b3)

    return dict(w_conv1=w_conv1, b_conv1=b_conv1,
                w_conv2=w_conv2, b_conv2=b_conv2,
                c1=make_head(), c2=make_head(),
                out_dim=out_dim, l1=l1, l2=l2)


def params_for_kernel(params, state_dim, action_dim):
    """Kernel-facing arrays: Toeplitz convs + fused heads.  MXU-side weights
    (m1, m2, w1f, w2) in bf16; VPU-side weights (w1a, w3) and biases in f32."""
    m1, b1v, l1 = _conv1d_to_matrix(params["w_conv1"], params["b_conv1"],
                                    state_dim, stride=2, pad=2)
    m2, b2v, l2 = _conv1d_to_matrix(params["w_conv2"], params["b_conv2"],
                                    l1, stride=2, pad=1)
    F = params["out_dim"]
    c1, c2 = params["c1"], params["c2"]
    H = c1["w2"].shape[0]

    # Fuse the two heads: stack layer-1, block-diagonal layer 2, stacked row
    # for layer 3 (consumed on the VPU/XLU, so stays f32).
    w1f = jnp.concatenate([c1["w1"][:F, :], c2["w1"][:F, :]], axis=1)   # (F, 2H)
    w1a = jnp.concatenate([c1["w1"][F:, :], c2["w1"][F:, :]], axis=1)   # (A, 2H)
    b1 = jnp.concatenate([c1["b1"], c2["b1"]], axis=0)[None, :]         # (1, 2H)
    zHH = jnp.zeros((H, H), jnp.float32)
    w2 = jnp.block([[c1["w2"], zHH], [zHH, c2["w2"]]])                  # (2H, 2H)
    b2 = jnp.concatenate([c1["b2"], c2["b2"]], axis=0)[None, :]         # (1, 2H)
    w3row = jnp.concatenate([c1["w3"][:, 0], c2["w3"][:, 0]], axis=0)[None, :]
    b3 = jnp.concatenate([c1["b3"], c2["b3"]], axis=0)[None, :]         # (1, 2)

    bf16 = jnp.bfloat16
    return dict(
        m1=jnp.asarray(m1, bf16), b1v=jnp.asarray(b1v, jnp.float32)[None, :],
        m2=jnp.asarray(m2, bf16), b2v=jnp.asarray(b2v, jnp.float32)[None, :],
        w1f=w1f.astype(bf16), w1a=w1a.astype(jnp.float32),
        b1=b1.astype(jnp.float32),
        w2=w2.astype(bf16), b2=b2.astype(jnp.float32),
        w3=w3row.astype(jnp.float32), b3=b3.astype(jnp.float32),
    )


# ----------------------------------------------------------------------------
# Pure-JAX reference (mirrors the PyTorch forward) for a correctness check.
# ----------------------------------------------------------------------------
def _bf16_roundtrip(x):
    return jnp.asarray(x, jnp.bfloat16).astype(jnp.float32)


def quantize_params_like_kernel(params):
    """Round weights through bf16 so the f32 reference matches the bf16-weight
    kernel closely (biases stay f32 in both)."""
    q = dict(params)
    q["w_conv1"] = _bf16_roundtrip(params["w_conv1"])
    q["w_conv2"] = _bf16_roundtrip(params["w_conv2"])
    for head in ("c1", "c2"):
        h = dict(params[head])
        for k in ("w1", "w2", "w3"):
            h[k] = _bf16_roundtrip(h[k])
        q[head] = h
    return q


def reference_forward(state, action, params):
    x = state[:, None, :]  # (B, 1, L)  -- NCW
    h = lax.conv_general_dilated(x, params["w_conv1"], window_strides=(2,),
                                 padding=[(2, 2)],
                                 dimension_numbers=("NCH", "OIH", "NCH"))
    h = jnp.maximum(h + params["b_conv1"][None, :, None], 0.0)
    h = lax.conv_general_dilated(h, params["w_conv2"], window_strides=(2,),
                                 padding=[(1, 1)],
                                 dimension_numbers=("NCH", "OIH", "NCH"))
    h = jnp.maximum(h + params["b_conv2"][None, :, None], 0.0)
    feat = h.reshape(h.shape[0], -1)                 # channel-major flatten
    xcat = jnp.concatenate([feat, action], axis=1)

    def mlp(x, p):
        z = jnp.maximum(x @ p["w1"] + p["b1"], 0.0)
        z = jnp.maximum(z @ p["w2"] + p["b2"], 0.0)
        return z @ p["w3"] + p["b3"]

    return mlp(xcat, params["c1"]), mlp(xcat, params["c2"])


# ----------------------------------------------------------------------------
if __name__ == "__main__":
    STATE_DIM, ACTION_DIM, HIDDEN_DIM = 16, 4, 32

    root = jax.random.PRNGKey(0)
    k_state, k_action, k_params = jax.random.split(root, 3)

    params = init_params(k_params, STATE_DIM, ACTION_DIM, HIDDEN_DIM)
    kparams = params_for_kernel(params, STATE_DIM, ACTION_DIM)
    ref_params = quantize_params_like_kernel(params)

    # Test 1: toy batch (single grid step, full-batch block).
    # Test 2: larger batch exercising the batch-tiled "parallel" grid path
    #         (>= 2 grid steps on dual-TensorCore chips).
    for B in (4, 512):
        ks, ka = jax.random.split(jax.random.fold_in(k_state, B))
        state = jax.random.normal(ks, (B, STATE_DIM), jnp.float32)
        action = jax.random.normal(ka, (B, ACTION_DIM), jnp.float32)

        q1, q2 = double_conv_critic_forward(state, action, kparams)
        q1, q2 = jax.block_until_ready((q1, q2))

        r1, r2 = reference_forward(state, action, ref_params)
        # Tolerance accounts for the bf16 activation operands fed to the MXU
        # (the f32 reference only bf16-rounds the weights).
        np.testing.assert_allclose(np.asarray(q1), np.asarray(r1),
                                   rtol=1e-2, atol=1e-2)
        np.testing.assert_allclose(np.asarray(q2), np.asarray(r2),
                                   rtol=1e-2, atol=1e-2)

    print("KERNEL_OK")
</pallas_src>

<mosaic_0001>
module attributes {stable_mosaic.version = 11 : i64} {
  func.func @_critic_kernel(%arg0: i32, %arg1: memref<4x16xf32, #tpu.memory_space<vmem>>, %arg2: memref<4x4xf32, #tpu.memory_space<vmem>>, %arg3: memref<16x128xbf16, #tpu.memory_space<vmem>>, %arg4: memref<1x128xf32, #tpu.memory_space<vmem>>, %arg5: memref<128x128xbf16, #tpu.memory_space<vmem>>, %arg6: memref<1x128xf32, #tpu.memory_space<vmem>>, %arg7: memref<128x64xbf16, #tpu.memory_space<vmem>>, %arg8: memref<4x64xf32, #tpu.memory_space<vmem>>, %arg9: memref<1x64xf32, #tpu.memory_space<vmem>>, %arg10: memref<64x64xbf16, #tpu.memory_space<vmem>>, %arg11: memref<1x64xf32, #tpu.memory_space<vmem>>, %arg12: memref<1x64xf32, #tpu.memory_space<vmem>>, %arg13: memref<1x2xf32, #tpu.memory_space<vmem>>, %arg14: memref<4x2xf32, #tpu.memory_space<vmem>>) attributes {dimension_semantics = [#tpu.dimension_semantics<parallel>], iteration_bounds = array<i64: 1>, scalar_prefetch = 0 : i64, scratch_operands = 0 : i64, tpu.core_type = #tpu.core_type<tc>, window_params = [{transform_indices = @transform_0, window_bounds = array<i64: 4, 16>}, {transform_indices = @transform_1, window_bounds = array<i64: 4, 4>}, {pipeline_mode = #tpu.pipeline_mode<synchronous>, transform_indices = @transform_2, window_bounds = array<i64: 16, 128>}, {pipeline_mode = #tpu.pipeline_mode<synchronous>, transform_indices = @transform_3, window_bounds = array<i64: 1, 128>}, {pipeline_mode = #tpu.pipeline_mode<synchronous>, transform_indices = @transform_4, window_bounds = array<i64: 128, 128>}, {pipeline_mode = #tpu.pipeline_mode<synchronous>, transform_indices = @transform_5, window_bounds = array<i64: 1, 128>}, {pipeline_mode = #tpu.pipeline_mode<synchronous>, transform_indices = @transform_6, window_bounds = array<i64: 128, 64>}, {pipeline_mode = #tpu.pipeline_mode<synchronous>, transform_indices = @transform_7, window_bounds = array<i64: 4, 64>}, {pipeline_mode = #tpu.pipeline_mode<synchronous>, transform_indices = @transform_8, window_bounds = array<i64: 1, 64>}, {pipeline_mode = #tpu.pipeline_mode<synchronous>, transform_indices = @transform_9, window_bounds = array<i64: 64, 64>}, {pipeline_mode = #tpu.pipeline_mode<synchronous>, transform_indices = @transform_10, window_bounds = array<i64: 1, 64>}, {pipeline_mode = #tpu.pipeline_mode<synchronous>, transform_indices = @transform_11, window_bounds = array<i64: 1, 64>}, {pipeline_mode = #tpu.pipeline_mode<synchronous>, transform_indices = @transform_12, window_bounds = array<i64: 1, 2>}, {transform_indices = @transform_13, window_bounds = array<i64: 4, 2>}]} {
    %c0 = arith.constant 0 : index
    %c0_0 = arith.constant 0 : index
    %0 = vector.load %arg1[%c0, %c0_0] : memref<4x16xf32, #tpu.memory_space<vmem>>, vector<4x16xf32>
    %c0_1 = arith.constant 0 : index
    %c0_2 = arith.constant 0 : index
    %1 = vector.load %arg2[%c0_1, %c0_2] : memref<4x4xf32, #tpu.memory_space<vmem>>, vector<4x4xf32>
    %2 = arith.truncf %0 : vector<4x16xf32> to vector<4x16xbf16>
    %c0_3 = arith.constant 0 : index
    %c0_4 = arith.constant 0 : index
    %3 = vector.load %arg3[%c0_3, %c0_4] : memref<16x128xbf16, #tpu.memory_space<vmem>>, vector<16x128xbf16>
    %cst = arith.constant dense<0.000000e+00> : vector<4x128xf32>
    %4 = tpu.matmul %2, %3, %cst {dimension_numbers = #tpu.dot_dimension_numbers<[1], [0], [0], [1], [0, 0, 1, 1], [], []>} : vector<4x16xbf16>, vector<16x128xbf16>, vector<4x128xf32> -> vector<4x128xf32>
    %c0_5 = arith.constant 0 : index
    %c0_6 = arith.constant 0 : index
    %5 = vector.load %arg4[%c0_5, %c0_6] : memref<1x128xf32, #tpu.memory_space<vmem>>, vector<1x128xf32>
    %6 = vector.broadcast %5 : vector<1x128xf32> to vector<4x128xf32>
    %7 = arith.addf %4, %6 : vector<4x128xf32>
    %cst_7 = arith.constant 0.000000e+00 : f32
    %8 = vector.broadcast %cst_7 : f32 to vector<4x128xf32>
    %9 = arith.maximumf %7, %8 : vector<4x128xf32>
    %10 = arith.truncf %9 : vector<4x128xf32> to vector<4x128xbf16>
    %c0_8 = arith.constant 0 : index
    %c0_9 = arith.constant 0 : index
    %11 = vector.load %arg5[%c0_8, %c0_9] : memref<128x128xbf16, #tpu.memory_space<vmem>>, vector<128x128xbf16>
    %cst_10 = arith.constant dense<0.000000e+00> : vector<4x128xf32>
    %12 = tpu.matmul %10, %11, %cst_10 {dimension_numbers = #tpu.dot_dimension_numbers<[1], [0], [0], [1], [0, 0, 1, 1], [], []>} : vector<4x128xbf16>, vector<128x128xbf16>, vector<4x128xf32> -> vector<4x128xf32>
    %c0_11 = arith.constant 0 : index
    %c0_12 = arith.constant 0 : index
    %13 = vector.load %arg6[%c0_11, %c0_12] : memref<1x128xf32, #tpu.memory_space<vmem>>, vector<1x128xf32>
    %14 = vector.broadcast %13 : vector<1x128xf32> to vector<4x128xf32>
    %15 = arith.addf %12, %14 : vector<4x128xf32>
    %cst_13 = arith.constant 0.000000e+00 : f32
    %16 = vector.broadcast %cst_13 : f32 to vector<4x128xf32>
    %17 = arith.maximumf %15, %16 : vector<4x128xf32>
    %18 = arith.truncf %17 : vector<4x128xf32> to vector<4x128xbf16>
    %c0_14 = arith.constant 0 : index
    %c0_15 = arith.constant 0 : index
    %19 = vector.load %arg7[%c0_14, %c0_15] : memref<128x64xbf16, #tpu.memory_space<vmem>>, vector<128x64xbf16>
    %cst_16 = arith.constant dense<0.000000e+00> : vector<4x64xf32>
    %20 = tpu.matmul %18, %19, %cst_16 {dimension_numbers = #tpu.dot_dimension_numbers<[1], [0], [0], [1], [0, 0, 1, 1], [], []>} : vector<4x128xbf16>, vector<128x64xbf16>, vector<4x64xf32> -> vector<4x64xf32>
    %c0_17 = arith.constant 0 : index
    %c0_18 = arith.constant 0 : index
    %21 = vector.load %arg9[%c0_17, %c0_18] : memref<1x64xf32, #tpu.memory_space<vmem>>, vector<1x64xf32>
    %22 = vector.broadcast %21 : vector<1x64xf32> to vector<4x64xf32>
    %23 = arith.addf %20, %22 : vector<4x64xf32>
    %c0_19 = arith.constant 0 : index
    %c0_20 = arith.constant 0 : index
    %24 = vector.load %arg8[%c0_19, %c0_20] : memref<4x64xf32, #tpu.memory_space<vmem>>, vector<4x64xf32>
    %25 = vector.extract_strided_slice %1 {offsets = [0, 0], sizes = [4, 1], strides = [1, 1]} : vector<4x4xf32> to vector<4x1xf32>
    %26 = vector.extract_strided_slice %24 {offsets = [0, 0], sizes = [1, 64], strides = [1, 1]} : vector<4x64xf32> to vector<1x64xf32>
    %27 = vector.broadcast %25 : vector<4x1xf32> to vector<4x64xf32>
    %28 = vector.broadcast %26 : vector<1x64xf32> to vector<4x64xf32>
    %29 = arith.mulf %27, %28 : vector<4x64xf32>
    %30 = arith.addf %23, %29 : vector<4x64xf32>
    %31 = vector.extract_strided_slice %1 {offsets = [0, 1], sizes = [4, 1], strides = [1, 1]} : vector<4x4xf32> to vector<4x1xf32>
    %32 = vector.extract_strided_slice %24 {offsets = [1, 0], sizes = [1, 64], strides = [1, 1]} : vector<4x64xf32> to vector<1x64xf32>
    %33 = vector.broadcast %31 : vector<4x1xf32> to vector<4x64xf32>
    %34 = vector.broadcast %32 : vector<1x64xf32> to vector<4x64xf32>
    %35 = arith.mulf %33, %34 : vector<4x64xf32>
    %36 = arith.addf %30, %35 : vector<4x64xf32>
    %37 = vector.extract_strided_slice %1 {offsets = [0, 2], sizes = [4, 1], strides = [1, 1]} : vector<4x4xf32> to vector<4x1xf32>
    %38 = vector.extract_strided_slice %24 {offsets = [2, 0], sizes = [1, 64], strides = [1, 1]} : vector<4x64xf32> to vector<1x64xf32>
    %39 = vector.broadcast %37 : vector<4x1xf32> to vector<4x64xf32>
    %40 = vector.broadcast %38 : vector<1x64xf32> to vector<4x64xf32>
    %41 = arith.mulf %39, %40 : vector<4x64xf32>
    %42 = arith.addf %36, %41 : vector<4x64xf32>
    %43 = vector.extract_strided_slice %1 {offsets = [0, 3], sizes = [4, 1], strides = [1, 1]} : vector<4x4xf32> to vector<4x1xf32>
    %44 = vector.extract_strided_slice %24 {offsets = [3, 0], sizes = [1, 64], strides = [1, 1]} : vector<4x64xf32> to vector<1x64xf32>
    %45 = vector.broadcast %43 : vector<4x1xf32> to vector<4x64xf32>
    %46 = vector.broadcast %44 : vector<1x64xf32> to vector<4x64xf32>
    %47 = arith.mulf %45, %46 : vector<4x64xf32>
    %48 = arith.addf %42, %47 : vector<4x64xf32>
    %cst_21 = arith.constant 0.000000e+00 : f32
    %49 = vector.broadcast %cst_21 : f32 to vector<4x64xf32>
    %50 = arith.maximumf %48, %49 : vector<4x64xf32>
    %51 = arith.truncf %50 : vector<4x64xf32> to vector<4x64xbf16>
    %c0_22 = arith.constant 0 : index
    %c0_23 = arith.constant 0 : index
    %52 = vector.load %arg10[%c0_22, %c0_23] : memref<64x64xbf16, #tpu.memory_space<vmem>>, vector<64x64xbf16>
    %cst_24 = arith.constant dense<0.000000e+00> : vector<4x64xf32>
    %53 = tpu.matmul %51, %52, %cst_24 {dimension_numbers = #tpu.dot_dimension_numbers<[1], [0], [0], [1], [0, 0, 1, 1], [], []>} : vector<4x64xbf16>, vector<64x64xbf16>, vector<4x64xf32> -> vector<4x64xf32>
    %c0_25 = arith.constant 0 : index
    %c0_26 = arith.constant 0 : index
    %54 = vector.load %arg11[%c0_25, %c0_26] : memref<1x64xf32, #tpu.memory_space<vmem>>, vector<1x64xf32>
    %55 = vector.broadcast %54 : vector<1x64xf32> to vector<4x64xf32>
    %56 = arith.addf %53, %55 : vector<4x64xf32>
    %cst_27 = arith.constant 0.000000e+00 : f32
    %57 = vector.broadcast %cst_27 : f32 to vector<4x64xf32>
    %58 = arith.maximumf %56, %57 : vector<4x64xf32>
    %c0_28 = arith.constant 0 : index
    %c0_29 = arith.constant 0 : index
    %59 = vector.load %arg12[%c0_28, %c0_29] : memref<1x64xf32, #tpu.memory_space<vmem>>, vector<1x64xf32>
    %60 = vector.broadcast %59 : vector<1x64xf32> to vector<4x64xf32>
    %61 = arith.mulf %58, %60 : vector<4x64xf32>
    %62 = vector.extract_strided_slice %61 {offsets = [0, 0], sizes = [4, 32], strides = [1, 1]} : vector<4x64xf32> to vector<4x32xf32>
    %cst_30 = arith.constant dense<0.000000e+00> : vector<4xf32>
    %63 = vector.multi_reduction <add>, %62, %cst_30 [1] : vector<4x32xf32> to vector<4xf32>
    %64 = vector.shape_cast %63 : vector<4xf32> to vector<4x1xf32>
    %65 = vector.extract_strided_slice %61 {offsets = [0, 32], sizes = [4, 32], strides = [1, 1]} : vector<4x64xf32> to vector<4x32xf32>
    %cst_31 = arith.constant dense<0.000000e+00> : vector<4xf32>
    %66 = vector.multi_reduction <add>, %65, %cst_31 [1] : vector<4x32xf32> to vector<4xf32>
    %67 = vector.shape_cast %66 : vector<4xf32> to vector<4x1xf32>
    %68 = tpu.concatenate %64, %67 in 1 : vector<4x1xf32>, vector<4x1xf32> -> vector<4x2xf32>
    %c0_32 = arith.constant 0 : index
    %c0_33 = arith.constant 0 : index
    %69 = vector.load %arg13[%c0_32, %c0_33] : memref<1x2xf32, #tpu.memory_space<vmem>>, vector<1x2xf32>
    %70 = vector.broadcast %69 : vector<1x2xf32> to vector<4x2xf32>
    %71 = arith.addf %68, %70 : vector<4x2xf32>
    %c0_34 = arith.constant 0 : index
    %c0_35 = arith.constant 0 : index
    %72 = vector.load %arg14[%c0_34, %c0_35] : memref<4x2xf32, #tpu.memory_space<vmem>>, vector<4x2xf32>
    tpu.vector_store %arg14[%c0_34, %c0_35], %71 {strides = array<i32>} : memref<4x2xf32, #tpu.memory_space<vmem>>, vector<4x2xf32>,
    return
  }
  func.func @transform_0(%arg0: i32) -> (i32, i32) {
    %c0_i32 = arith.constant 0 : i32
    %c0_i32_0 = arith.constant 0 : i32
    return %arg0, %c0_i32 : i32, i32
  }
  func.func @transform_1(%arg0: i32) -> (i32, i32) {
    %c0_i32 = arith.constant 0 : i32
    %c0_i32_0 = arith.constant 0 : i32
    return %arg0, %c0_i32 : i32, i32
  }
  func.func @transform_2(%arg0: i32) -> (i32, i32) {
    %c0_i32 = arith.constant 0 : i32
    %c0_i32_0 = arith.constant 0 : i32
    %c0_i32_1 = arith.constant 0 : i32
    return %c0_i32, %c0_i32_0 : i32, i32
  }
  func.func @transform_3(%arg0: i32) -> (i32, i32) {
    %c0_i32 = arith.constant 0 : i32
    %c0_i32_0 = arith.constant 0 : i32
    %c0_i32_1 = arith.constant 0 : i32
    return %c0_i32, %c0_i32_0 : i32, i32
  }
  func.func @transform_4(%arg0: i32) -> (i32, i32) {
    %c0_i32 = arith.constant 0 : i32
    %c0_i32_0 = arith.constant 0 : i32
    %c0_i32_1 = arith.constant 0 : i32
    return %c0_i32, %c0_i32_0 : i32, i32
  }
  func.func @transform_5(%arg0: i32) -> (i32, i32) {
    %c0_i32 = arith.constant 0 : i32
    %c0_i32_0 = arith.constant 0 : i32
    %c0_i32_1 = arith.constant 0 : i32
    return %c0_i32, %c0_i32_0 : i32, i32
  }
  func.func @transform_6(%arg0: i32) -> (i32, i32) {
    %c0_i32 = arith.constant 0 : i32
    %c0_i32_0 = arith.constant 0 : i32
    %c0_i32_1 = arith.constant 0 : i32
    return %c0_i32, %c0_i32_0 : i32, i32
  }
  func.func @transform_7(%arg0: i32) -> (i32, i32) {
    %c0_i32 = arith.constant 0 : i32
    %c0_i32_0 = arith.constant 0 : i32
    %c0_i32_1 = arith.constant 0 : i32
    return %c0_i32, %c0_i32_0 : i32, i32
  }
  func.func @transform_8(%arg0: i32) -> (i32, i32) {
    %c0_i32 = arith.constant 0 : i32
    %c0_i32_0 = arith.constant 0 : i32
    %c0_i32_1 = arith.constant 0 : i32
    return %c0_i32, %c0_i32_0 : i32, i32
  }
  func.func @transform_9(%arg0: i32) -> (i32, i32) {
    %c0_i32 = arith.constant 0 : i32
    %c0_i32_0 = arith.constant 0 : i32
    %c0_i32_1 = arith.constant 0 : i32
    return %c0_i32, %c0_i32_0 : i32, i32
  }
  func.func @transform_10(%arg0: i32) -> (i32, i32) {
    %c0_i32 = arith.constant 0 : i32
    %c0_i32_0 = arith.constant 0 : i32
    %c0_i32_1 = arith.constant 0 : i32
    return %c0_i32, %c0_i32_0 : i32, i32
  }
  func.func @transform_11(%arg0: i32) -> (i32, i32) {
    %c0_i32 = arith.constant 0 : i32
    %c0_i32_0 = arith.constant 0 : i32
    %c0_i32_1 = arith.constant 0 : i32
    return %c0_i32, %c0_i32_0 : i32, i32
  }
  func.func @transform_12(%arg0: i32) -> (i32, i32) {
    %c0_i32 = arith.constant 0 : i32
    %c0_i32_0 = arith.constant 0 : i32
    %c0_i32_1 = arith.constant 0 : i32
    return %c0_i32, %c0_i32_0 : i32, i32
  }
  func.func @transform_13(%arg0: i32) -> (i32, i32) {
    %c0_i32 = arith.constant 0 : i32
    %c0_i32_0 = arith.constant 0 : i32
    return %arg0, %c0_i32 : i32, i32
  }
}

module attributes {stable_mosaic.version = 11 : i64} {
  func.func @_critic_kernel(%arg0: i32, %arg1: memref<4x16xf32, #tpu.memory_space<vmem>>, %arg2: memref<4x4xf32, #tpu.memory_space<vmem>>, %arg3: memref<16x128xbf16, #tpu.memory_space<vmem>>, %arg4: memref<1x128xf32, #tpu.memory_space<vmem>>, %arg5: memref<128x128xbf16, #tpu.memory_space<vmem>>, %arg6: memref<1x128xf32, #tpu.memory_space<vmem>>, %arg7: memref<128x64xbf16, #tpu.memory_space<vmem>>, %arg8: memref<4x64xf32, #tpu.memory_space<vmem>>, %arg9: memref<1x64xf32, #tpu.memory_space<vmem>>, %arg10: memref<64x64xbf16, #tpu.memory_space<vmem>>, %arg11: memref<1x64xf32, #tpu.memory_space<vmem>>, %arg12: memref<1x64xf32, #tpu.memory_space<vmem>>, %arg13: memref<1x2xf32, #tpu.memory_space<vmem>>, %arg14: memref<4x2xf32, #tpu.memory_space<vmem>>) attributes {dimension_semantics = [#tpu.dimension_semantics<parallel>], iteration_bounds = array<i64: 1>, scalar_prefetch = 0 : i64, scratch_operands = 0 : i64, tpu.core_type = #tpu.core_type<tc>, window_params = [{transform_indices = @transform_0, window_bounds = array<i64: 4, 16>}, {transform_indices = @transform_1, window_bounds = array<i64: 4, 4>}, {pipeline_mode = #tpu.pipeline_mode<synchronous>, transform_indices = @transform_2, window_bounds = array<i64: 16, 128>}, {pipeline_mode = #tpu.pipeline_mode<synchronous>, transform_indices = @transform_3, window_bounds = array<i64: 1, 128>}, {pipeline_mode = #tpu.pipeline_mode<synchronous>, transform_indices = @transform_4, window_bounds = array<i64: 128, 128>}, {pipeline_mode = #tpu.pipeline_mode<synchronous>, transform_indices = @transform_5, window_bounds = array<i64: 1, 128>}, {pipeline_mode = #tpu.pipeline_mode<synchronous>, transform_indices = @transform_6, window_bounds = array<i64: 128, 64>}, {pipeline_mode = #tpu.pipeline_mode<synchronous>, transform_indices = @transform_7, window_bounds = array<i64: 4, 64>}, {pipeline_mode = #tpu.pipeline_mode<synchronous>, transform_indices = @transform_8, window_bounds = array<i64: 1, 64>}, {pipeline_mode = #tpu.pipeline_mode<synchronous>, transform_indices = @transform_9, window_bounds = array<i64: 64, 64>}, {pipeline_mode = #tpu.pipeline_mode<synchronous>, transform_indices = @transform_10, window_bounds = array<i64: 1, 64>}, {pipeline_mode = #tpu.pipeline_mode<synchronous>, transform_indices = @transform_11, window_bounds = array<i64: 1, 64>}, {pipeline_mode = #tpu.pipeline_mode<synchronous>, transform_indices = @transform_12, window_bounds = array<i64: 1, 2>}, {transform_indices = @transform_13, window_bounds = array<i64: 4, 2>}]} {
    %c0 = arith.constant 0 : index
    %c0_0 = arith.constant 0 : index
    %0 = vector.load %arg1[%c0, %c0_0] : memref<4x16xf32, #tpu.memory_space<vmem>>, vector<4x16xf32>
    %c0_1 = arith.constant 0 : index
    %c0_2 = arith.constant 0 : index
    %1 = vector.load %arg2[%c0_1, %c0_2] : memref<4x4xf32, #tpu.memory_space<vmem>>, vector<4x4xf32>
    %2 = arith.truncf %0 : vector<4x16xf32> to vector<4x16xbf16>
    %c0_3 = arith.constant 0 : index
    %c0_4 = arith.constant 0 : index
    %3 = vector.load %arg3[%c0_3, %c0_4] : memref<16x128xbf16, #tpu.memory_space<vmem>>, vector<16x128xbf16>
    %cst = arith.constant dense<0.000000e+00> : vector<4x128xf32>
    %4 = tpu.matmul %2, %3, %cst {dimension_numbers = #tpu.dot_dimension_numbers<[1], [0], [0], [1], [0, 0, 1, 1], [], []>} : vector<4x16xbf16>, vector<16x128xbf16>, vector<4x128xf32> -> vector<4x128xf32>
    %c0_5 = arith.constant 0 : index
    %c0_6 = arith.constant 0 : index
    %5 = vector.load %arg4[%c0_5, %c0_6] : memref<1x128xf32, #tpu.memory_space<vmem>>, vector<1x128xf32>
    %6 = vector.broadcast %5 : vector<1x128xf32> to vector<4x128xf32>
    %7 = arith.addf %4, %6 : vector<4x128xf32>
    %cst_7 = arith.constant 0.000000e+00 : f32
    %8 = vector.broadcast %cst_7 : f32 to vector<4x128xf32>
    %9 = arith.maximumf %7, %8 : vector<4x128xf32>
    %10 = arith.truncf %9 : vector<4x128xf32> to vector<4x128xbf16>
    %c0_8 = arith.constant 0 : index
    %c0_9 = arith.constant 0 : index
    %11 = vector.load %arg5[%c0_8, %c0_9] : memref<128x128xbf16, #tpu.memory_space<vmem>>, vector<128x128xbf16>
    %cst_10 = arith.constant dense<0.000000e+00> : vector<4x128xf32>
    %12 = tpu.matmul %10, %11, %cst_10 {dimension_numbers = #tpu.dot_dimension_numbers<[1], [0], [0], [1], [0, 0, 1, 1], [], []>} : vector<4x128xbf16>, vector<128x128xbf16>, vector<4x128xf32> -> vector<4x128xf32>
    %c0_11 = arith.constant 0 : index
    %c0_12 = arith.constant 0 : index
    %13 = vector.load %arg6[%c0_11, %c0_12] : memref<1x128xf32, #tpu.memory_space<vmem>>, vector<1x128xf32>
    %14 = vector.broadcast %13 : vector<1x128xf32> to vector<4x128xf32>
    %15 = arith.addf %12, %14 : vector<4x128xf32>
    %cst_13 = arith.constant 0.000000e+00 : f32
    %16 = vector.broadcast %cst_13 : f32 to vector<4x128xf32>
    %17 = arith.maximumf %15, %16 : vector<4x128xf32>
    %18 = arith.truncf %17 : vector<4x128xf32> to vector<4x128xbf16>
    %c0_14 = arith.constant 0 : index
    %c0_15 = arith.constant 0 : index
    %19 = vector.load %arg7[%c0_14, %c0_15] : memref<128x64xbf16, #tpu.memory_space<vmem>>, vector<128x64xbf16>
    %cst_16 = arith.constant dense<0.000000e+00> : vector<4x64xf32>
    %20 = tpu.matmul %18, %19, %cst_16 {dimension_numbers = #tpu.dot_dimension_numbers<[1], [0], [0], [1], [0, 0, 1, 1], [], []>} : vector<4x128xbf16>, vector<128x64xbf16>, vector<4x64xf32> -> vector<4x64xf32>
    %c0_17 = arith.constant 0 : index
    %c0_18 = arith.constant 0 : index
    %21 = vector.load %arg9[%c0_17, %c0_18] : memref<1x64xf32, #tpu.memory_space<vmem>>, vector<1x64xf32>
    %22 = vector.broadcast %21 : vector<1x64xf32> to vector<4x64xf32>
    %23 = arith.addf %20, %22 : vector<4x64xf32>
    %c0_19 = arith.constant 0 : index
    %c0_20 = arith.constant 0 : index
    %24 = vector.load %arg8[%c0_19, %c0_20] : memref<4x64xf32, #tpu.memory_space<vmem>>, vector<4x64xf32>
    %25 = vector.extract_strided_slice %1 {offsets = [0, 0], sizes = [4, 1], strides = [1, 1]} : vector<4x4xf32> to vector<4x1xf32>
    %26 = vector.extract_strided_slice %24 {offsets = [0, 0], sizes = [1, 64], strides = [1, 1]} : vector<4x64xf32> to vector<1x64xf32>
    %27 = vector.broadcast %25 : vector<4x1xf32> to vector<4x64xf32>
    %28 = vector.broadcast %26 : vector<1x64xf32> to vector<4x64xf32>
    %29 = arith.mulf %27, %28 : vector<4x64xf32>
    %30 = arith.addf %23, %29 : vector<4x64xf32>
    %31 = vector.extract_strided_slice %1 {offsets = [0, 1], sizes = [4, 1], strides = [1, 1]} : vector<4x4xf32> to vector<4x1xf32>
    %32 = vector.extract_strided_slice %24 {offsets = [1, 0], sizes = [1, 64], strides = [1, 1]} : vector<4x64xf32> to vector<1x64xf32>
    %33 = vector.broadcast %31 : vector<4x1xf32> to vector<4x64xf32>
    %34 = vector.broadcast %32 : vector<1x64xf32> to vector<4x64xf32>
    %35 = arith.mulf %33, %34 : vector<4x64xf32>
    %36 = arith.addf %30, %35 : vector<4x64xf32>
    %37 = vector.extract_strided_slice %1 {offsets = [0, 2], sizes = [4, 1], strides = [1, 1]} : vector<4x4xf32> to vector<4x1xf32>
    %38 = vector.extract_strided_slice %24 {offsets = [2, 0], sizes = [1, 64], strides = [1, 1]} : vector<4x64xf32> to vector<1x64xf32>
    %39 = vector.broadcast %37 : vector<4x1xf32> to vector<4x64xf32>
    %40 = vector.broadcast %38 : vector<1x64xf32> to vector<4x64xf32>
    %41 = arith.mulf %39, %40 : vector<4x64xf32>
    %42 = arith.addf %36, %41 : vector<4x64xf32>
    %43 = vector.extract_strided_slice %1 {offsets = [0, 3], sizes = [4, 1], strides = [1, 1]} : vector<4x4xf32> to vector<4x1xf32>
    %44 = vector.extract_strided_slice %24 {offsets = [3, 0], sizes = [1, 64], strides = [1, 1]} : vector<4x64xf32> to vector<1x64xf32>
    %45 = vector.broadcast %43 : vector<4x1xf32> to vector<4x64xf32>
    %46 = vector.broadcast %44 : vector<1x64xf32> to vector<4x64xf32>
    %47 = arith.mulf %45, %46 : vector<4x64xf32>
    %48 = arith.addf %42, %47 : vector<4x64xf32>
    %cst_21 = arith.constant 0.000000e+00 : f32
    %49 = vector.broadcast %cst_21 : f32 to vector<4x64xf32>
    %50 = arith.maximumf %48, %49 : vector<4x64xf32>
    %51 = arith.truncf %50 : vector<4x64xf32> to vector<4x64xbf16>
    %c0_22 = arith.constant 0 : index
    %c0_23 = arith.constant 0 : index
    %52 = vector.load %arg10[%c0_22, %c0_23] : memref<64x64xbf16, #tpu.memory_space<vmem>>, vector<64x64xbf16>
    %cst_24 = arith.constant dense<0.000000e+00> : vector<4x64xf32>
    %53 = tpu.matmul %51, %52, %cst_24 {dimension_numbers = #tpu.dot_dimension_numbers<[1], [0], [0], [1], [0, 0, 1, 1], [], []>} : vector<4x64xbf16>, vector<64x64xbf16>, vector<4x64xf32> -> vector<4x64xf32>
    %c0_25 = arith.constant 0 : index
    %c0_26 = arith.constant 0 : index
    %54 = vector.load %arg11[%c0_25, %c0_26] : memref<1x64xf32, #tpu.memory_space<vmem>>, vector<1x64xf32>
    %55 = vector.broadcast %54 : vector<1x64xf32> to vector<4x64xf32>
    %56 = arith.addf %53, %55 : vector<4x64xf32>
    %cst_27 = arith.constant 0.000000e+00 : f32
    %57 = vector.broadcast %cst_27 : f32 to vector<4x64xf32>
    %58 = arith.maximumf %56, %57 : vector<4x64xf32>
    %c0_28 = arith.constant 0 : index
    %c0_29 = arith.constant 0 : index
    %59 = vector.load %arg12[%c0_28, %c0_29] : memref<1x64xf32, #tpu.memory_space<vmem>>, vector<1x64xf32>
    %60 = vector.broadcast %59 : vector<1x64xf32> to vector<4x64xf32>
    %61 = arith.mulf %58, %60 : vector<4x64xf32>
    %62 = vector.extract_strided_slice %61 {offsets = [0, 0], sizes = [4, 32], strides = [1, 1]} : vector<4x64xf32> to vector<4x32xf32>
    %cst_30 = arith.constant dense<0.000000e+00> : vector<4xf32>
    %63 = vector.multi_reduction <add>, %62, %cst_30 [1] : vector<4x32xf32> to vector<4xf32>
    %64 = vector.shape_cast %63 : vector<4xf32> to vector<4x1xf32>
    %65 = vector.extract_strided_slice %61 {offsets = [0, 32], sizes = [4, 32], strides = [1, 1]} : vector<4x64xf32> to vector<4x32xf32>
    %cst_31 = arith.constant dense<0.000000e+00> : vector<4xf32>
    %66 = vector.multi_reduction <add>, %65, %cst_31 [1] : vector<4x32xf32> to vector<4xf32>
    %67 = vector.shape_cast %66 : vector<4xf32> to vector<4x1xf32>
    %68 = tpu.concatenate %64, %67 in 1 : vector<4x1xf32>, vector<4x1xf32> -> vector<4x2xf32>
    %c0_32 = arith.constant 0 : index
    %c0_33 = arith.constant 0 : index
    %69 = vector.load %arg13[%c0_32, %c0_33] : memref<1x2xf32, #tpu.memory_space<vmem>>, vector<1x2xf32>
    %70 = vector.broadcast %69 : vector<1x2xf32> to vector<4x2xf32>
    %71 = arith.addf %68, %70 : vector<4x2xf32>
    %c0_34 = arith.constant 0 : index
    %c0_35 = arith.constant 0 : index
    %72 = vector.load %arg14[%c0_34, %c0_35] : memref<4x2xf32, #tpu.memory_space<vmem>>, vector<4x2xf32>
    tpu.vector_store %arg14[%c0_34, %c0_35], %71 {strides = array<i32>} : memref<4x2xf32, #tpu.memory_space<vmem>>, vector<4x2xf32>,
    return
  }
  func.func @transform_0(%arg0: i32) -> (i32, i32) {
    %c0_i32 = arith.constant 0 : i32
    %c0_i32_0 = arith.constant 0 : i32
    return %arg0, %c0_i32 : i32, i32
  }
  func.func @transform_1(%arg0: i32) -> (i32, i32) {
    %c0_i32 = arith.constant 0 : i32
    %c0_i32_0 = arith.constant 0 : i32
    return %arg0, %c0_i32 : i32, i32
  }
  func.func @transform_2(%arg0: i32) -> (i32, i32) {
    %c0_i32 = arith.constant 0 : i32
    %c0_i32_0 = arith.constant 0 : i32
    %c0_i32_1 = arith.constant 0 : i32
    return %c0_i32, %c0_i32_0 : i32, i32
  }
  func.func @transform_3(%arg0: i32) -> (i32, i32) {
    %c0_i32 = arith.constant 0 : i32
    %c0_i32_0 = arith.constant 0 : i32
    %c0_i32_1 = arith.constant 0 : i32
    return %c0_i32, %c0_i32_0 : i32, i32
  }
  func.func @transform_4(%arg0: i32) -> (i32, i32) {
    %c0_i32 = arith.constant 0 : i32
    %c0_i32_0 = arith.constant 0 : i32
    %c0_i32_1 = arith.constant 0 : i32
    return %c0_i32, %c0_i32_0 : i32, i32
  }
  func.func @transform_5(%arg0: i32) -> (i32, i32) {
    %c0_i32 = arith.constant 0 : i32
    %c0_i32_0 = arith.constant 0 : i32
    %c0_i32_1 = arith.constant 0 : i32
    return %c0_i32, %c0_i32_0 : i32, i32
  }
  func.func @transform_6(%arg0: i32) -> (i32, i32) {
    %c0_i32 = arith.constant 0 : i32
    %c0_i32_0 = arith.constant 0 : i32
    %c0_i32_1 = arith.constant 0 : i32
    return %c0_i32, %c0_i32_0 : i32, i32
  }
  func.func @transform_7(%arg0: i32) -> (i32, i32) {
    %c0_i32 = arith.constant 0 : i32
    %c0_i32_0 = arith.constant 0 : i32
    %c0_i32_1 = arith.constant 0 : i32
    return %c0_i32, %c0_i32_0 : i32, i32
  }
  func.func @transform_8(%arg0: i32) -> (i32, i32) {
    %c0_i32 = arith.constant 0 : i32
    %c0_i32_0 = arith.constant 0 : i32
    %c0_i32_1 = arith.constant 0 : i32
    return %c0_i32, %c0_i32_0 : i32, i32
  }
  func.func @transform_9(%arg0: i32) -> (i32, i32) {
    %c0_i32 = arith.constant 0 : i32
    %c0_i32_0 = arith.constant 0 : i32
    %c0_i32_1 = arith.constant 0 : i32
    return %c0_i32, %c0_i32_0 : i32, i32
  }
  func.func @transform_10(%arg0: i32) -> (i32, i32) {
    %c0_i32 = arith.constant 0 : i32
    %c0_i32_0 = arith.constant 0 : i32
    %c0_i32_1 = arith.constant 0 : i32
    return %c0_i32, %c0_i32_0 : i32, i32
  }
  func.func @transform_11(%arg0: i32) -> (i32, i32) {
    %c0_i32 = arith.constant 0 : i32
    %c0_i32_0 = arith.constant 0 : i32
    %c0_i32_1 = arith.constant 0 : i32
    return %c0_i32, %c0_i32_0 : i32, i32
  }
  func.func @transform_12(%arg0: i32) -> (i32, i32) {
    %c0_i32 = arith.constant 0 : i32
    %c0_i32_0 = arith.constant 0 : i32
    %c0_i32_1 = arith.constant 0 : i32
    return %c0_i32, %c0_i32_0 : i32, i32
  }
  func.func @transform_13(%arg0: i32) -> (i32, i32) {
    %c0_i32 = arith.constant 0 : i32
    %c0_i32_0 = arith.constant 0 : i32
    return %arg0, %c0_i32 : i32, i32
  }
}

</mosaic_0001>

<llo_original>
// kernel: tpu_custom_call.1
$region0: #{tpu_custom_call.1}
  #allocation0 [shape = 'u32[]', space=smem, size = 0x4, offset = 0x4, fixed_abs, tag = 'smem constant byte address 0x4 - core index']
  #allocation1 [shape = 'u32[144,128]{1,0:T(1,128)}', space=vmem, size = 0x12000, scoped, tag = 'internal scratch']
  %s0 = inlined_call_operand.vmem [shape: f32[4,16], index: 0, kind: input, shape index: {}]
  %s1 = inlined_call_operand.hbm [shape: f32[4,4], index: 1, kind: input, shape index: {}]
  %s2 = inlined_call_operand.vmem [shape: bf16[16,128], index: 2, kind: input, shape index: {}]
  %s3 = inlined_call_operand.vmem [shape: f32[1,128], index: 3, kind: input, shape index: {}]
  %s4 = inlined_call_operand.vmem [shape: bf16[128,128], index: 4, kind: input, shape index: {}]
  %s5 = inlined_call_operand.vmem [shape: f32[1,128], index: 5, kind: input, shape index: {}]
  %s6 = inlined_call_operand.vmem [shape: bf16[128,64], index: 6, kind: input, shape index: {}]
  %s7 = inlined_call_operand.vmem [shape: f32[4,64], index: 7, kind: input, shape index: {}]
  %s8 = inlined_call_operand.vmem [shape: f32[1,64], index: 8, kind: input, shape index: {}]
  %s9 = inlined_call_operand.vmem [shape: bf16[64,64], index: 9, kind: input, shape index: {}]
  %s10 = inlined_call_operand.vmem [shape: f32[1,64], index: 10, kind: input, shape index: {}]
  %s11 = inlined_call_operand.vmem [shape: f32[1,64], index: 11, kind: input, shape index: {}]
  %s12 = inlined_call_operand.vmem [shape: f32[1,2], index: 12, kind: input, shape index: {}]
  %s13 = inlined_call_operand.vmem [shape: f32[4,2], index: 13, kind: output, shape index: {}]
  %s14 = sld [smem:[#allocation0]]
  $region66: #{tpu_custom_call.1} parent=0
    _
  %s16 = ssub.s32 1, %s14
  %s17 = scalar_select 0, %s16, %s14
  $region1: #{tpu_custom_call.1} parent=0
    #allocation2 [shape = 'u8[2048]{0}', space=vmem, size = 0x800, scoped, tag = 'input window, operand 1, single buffered']
    #allocation3 [shape = 's32[1]{0}', space=sflag, size = 0x4, scoped, tag = 'scoped memory for tpu_custom_call.1']
    %18 = vsyncpa [#allocation3], 0
    // Predicated region
    $region2: #{tpu_custom_call.1} parent=1 // pred_check
      _
    $region3: #{tpu_custom_call.1} parent=1 // pred_check_branch
      %20 = sbr.rel (0) target = $region5
    $region4: #{tpu_custom_call.1} parent=1 // pred_region
      _
    $region5: #{tpu_custom_call.1} parent=1 // pred_fallthru
      _
    // Predicated region
    $region6: #{tpu_custom_call.1} parent=1 // pred_check
      _
    $region7: #{tpu_custom_call.1} parent=1 // pred_check_branch
      %22 = sbr.rel (0) target = $region9
    $region8: #{tpu_custom_call.1} parent=1 // pred_region
      %s24 = ssub.s32 64, 64
      %25 = vsyncadd [#allocation3], %s24
      %s27 = sshll.u32 [#allocation2], 4
      %s28 = int_to_ptr.vmem [resolvable:$true] %s27
      %30 = dma.hbm_to_vmem [thread:$0]  %s1, 64, %s28, [#allocation3]
    $region9: #{tpu_custom_call.1} parent=1 // pred_fallthru
      _
    // Predicated region
    $region10: #{tpu_custom_call.1} parent=1 // pred_check
      _
    $region11: #{tpu_custom_call.1} parent=1 // pred_check_branch
      %32 = sbr.rel (0) target = $region13
    $region12: #{tpu_custom_call.1} parent=1 // pred_region
      _
    $region13: #{tpu_custom_call.1} parent=1 // pred_fallthru
      _
    // Predicated region
    $region14: #{tpu_custom_call.1} parent=1 // pred_check
      _
    $region15: #{tpu_custom_call.1} parent=1 // pred_check_branch
      %34 = sbr.rel (0) target = $region17
    $region16: #{tpu_custom_call.1} parent=1 // pred_region
      _
    $region17: #{tpu_custom_call.1} parent=1 // pred_fallthru
      _
    // Predicated region
    $region18: #{tpu_custom_call.1} parent=1 // pred_check
      _
    $region19: #{tpu_custom_call.1} parent=1 // pred_check_branch
      %36 = sbr.rel (0) target = $region21
    $region20: #{tpu_custom_call.1} parent=1 // pred_region
      _
    $region21: #{tpu_custom_call.1} parent=1 // pred_fallthru
      _
    // Predicated region
    $region22: #{tpu_custom_call.1} parent=1 // pred_check
      _
    $region23: #{tpu_custom_call.1} parent=1 // pred_check_branch
      %38 = sbr.rel (0) target = $region25
    $region24: #{tpu_custom_call.1} parent=1 // pred_region
      _
    $region25: #{tpu_custom_call.1} parent=1 // pred_fallthru
      _
    // Predicated region
    $region26: #{tpu_custom_call.1} parent=1 // pred_check
      _
    $region27: #{tpu_custom_call.1} parent=1 // pred_check_branch
      %40 = sbr.rel (0) target = $region29
    $region28: #{tpu_custom_call.1} parent=1 // pred_region
      _
    $region29: #{tpu_custom_call.1} parent=1 // pred_fallthru
      _
    // Predicated region
    $region30: #{tpu_custom_call.1} parent=1 // pred_check
      _
    $region31: #{tpu_custom_call.1} parent=1 // pred_check_branch
      %42 = sbr.rel (0) target = $region33
    $region32: #{tpu_custom_call.1} parent=1 // pred_region
      _
    $region33: #{tpu_custom_call.1} parent=1 // pred_fallthru
      _
    // Predicated region
    $region34: #{tpu_custom_call.1} parent=1 // pred_check
      _
    $region35: #{tpu_custom_call.1} parent=1 // pred_check_branch
      %44 = sbr.rel (0) target = $region37
    $region36: #{tpu_custom_call.1} parent=1 // pred_region
      _
    $region37: #{tpu_custom_call.1} parent=1 // pred_fallthru
      _
    // Predicated region
    $region38: #{tpu_custom_call.1} parent=1 // pred_check
      _
    $region39: #{tpu_custom_call.1} parent=1 // pred_check_branch
      %46 = sbr.rel (0) target = $region41
    $region40: #{tpu_custom_call.1} parent=1 // pred_region
      _
    $region41: #{tpu_custom_call.1} parent=1 // pred_fallthru
      _
    // Predicated region
    $region42: #{tpu_custom_call.1} parent=1 // pred_check
      _
    $region43: #{tpu_custom_call.1} parent=1 // pred_check_branch
      %48 = sbr.rel (0) target = $region45
    $region44: #{tpu_custom_call.1} parent=1 // pred_region
      _
    $region45: #{tpu_custom_call.1} parent=1 // pred_fallthru
      _
    // Predicated region
    $region46: #{tpu_custom_call.1} parent=1 // pred_check
      _
    $region47: #{tpu_custom_call.1} parent=1 // pred_check_branch
      %50 = sbr.rel (0) target = $region49
    $region48: #{tpu_custom_call.1} parent=1 // pred_region
      _
    $region49: #{tpu_custom_call.1} parent=1 // pred_fallthru
      _
    // Predicated region
    $region50: #{tpu_custom_call.1} parent=1 // pred_check
      _
    $region51: #{tpu_custom_call.1} parent=1 // pred_check_branch
      %52 = sbr.rel (0) target = $region53
    $region52: #{tpu_custom_call.1} parent=1 // pred_region
      _
    $region53: #{tpu_custom_call.1} parent=1 // pred_fallthru
      _
    // Predicated region
    $region54: #{tpu_custom_call.1} parent=1 // pred_check
      _
    $region55: #{tpu_custom_call.1} parent=1 // pred_check_branch
      %54 = sbr.rel (0) target = $region57
    $region56: #{tpu_custom_call.1} parent=1 // pred_region
      %55 = dma.done [#allocation3], 64
    $region57: #{tpu_custom_call.1} parent=1 // pred_fallthru
      _
    %v57 = vld [vmem:[%s0] sm:$0xf]
    %v58 = vld [vmem:[#allocation2] sm:$0xf]
    %v59 = vpack.c.bf16 %v57, %v57
    %v60 = vld [vmem:[%s2] sm:$0xf]
    %v61 = vld [vmem:[%s2 + $0x4] sm:$0xf]
    %v62 = vld [vmem:[%s3] sm:$0x1]
    %v64 = vlaneseq
    %v65 = vshrl.u32 %v64, 7
    %v66 = vsub.s32 0, %v65
    %v67 = vrot.slane %v62, %v66
    %v71 = vunpack.c.l.b16 %v60
    %v72 = vunpack.c.l.b16 %v61
    %v73 = vpack.c.b16 %v72, %v71
    %vm75 = vcmask 130048
    %v77 = vsel %vm75, %v59, 0
    %79 = vmatprep.subr.bf16.mxu0 0
    %80 = vmatpush1.bf16.msra.mxu0 %v73
    %81 = vmatprep.subr.bf16.mxu0 0
    %82 = vmatpush1.bf16.msra.mxu0 0
    %83 = vmatprep.subr.bf16.mxu0 0
    %84 = vmatpush1.bf16.msra.mxu0 0
    %85 = vmatprep.subr.bf16.mxu0 0
    %86 = vmatpush1.bf16.msra.mxu0 0
    %87 = vmatprep.subr.bf16.mxu0 0
    %88 = vmatpush1.bf16.msra.mxu0 0
    %89 = vmatprep.subr.bf16.mxu0 0
    %90 = vmatpush1.bf16.msra.mxu0 0
    %91 = vmatprep.subr.bf16.mxu0 0
    %92 = vmatpush1.bf16.msra.mxu0 0
    %93 = vmatprep.subr.bf16.mxu0 0
    %94 = vmatpush1.bf16.msra.mxu0 0
    %95 = vmatprep.subr.bf16.mxu0 0
    %96 = vmatpush1.bf16.msra.mxu0 0
    %97 = vmatprep.subr.bf16.mxu0 0
    %98 = vmatpush1.bf16.msra.mxu0 0
    %99 = vmatprep.subr.bf16.mxu0 0
    %100 = vmatpush1.bf16.msra.mxu0 0
    %101 = vmatprep.subr.bf16.mxu0 0
    %102 = vmatpush1.bf16.msra.mxu0 0
    %103 = vmatprep.subr.bf16.mxu0 0
    %104 = vmatpush1.bf16.msra.mxu0 0
    %105 = vmatprep.subr.bf16.mxu0 0
    %106 = vmatpush1.bf16.msra.mxu0 0
    %107 = vmatprep.subr.bf16.mxu0 0
    %108 = vmatpush1.bf16.msra.mxu0 0
    %109 = vmatprep.subr.bf16.mxu0 0
    %110 = vmatpush1.bf16.msra.mxu0 0
    %111 = vmatprep.mubr.bf16.mxu0 0
    %112 = vmatmul.mubr.bf16.gmra.mrb[0].mxu0 %v77
    %v113 = vpop.f32.mrb[0].mxu0
    %v114 = vadd.f32 %v67, %v113
    %v115 = vpop.f32.mrb[0].mxu0
    %v116 = vpop.f32.mrb[0].mxu0
    %v117 = vpop.f32.mrb[0].mxu0
    %118 = vdwg.mxu0
    %v119 = vmax.f32 %v114, 0.0
    %v120 = vpack.c.bf16 %v119, %v119
    %v121 = vld [vmem:[%s4] sm:$0xf]
    %v122 = vld [vmem:[%s4 + $0x4] sm:$0xf]
    %v123 = vld [vmem:[%s4 + $0x8] sm:$0xf]
    %v124 = vld [vmem:[%s4 + $0xc] sm:$0xf]
    %v125 = vld [vmem:[%s4 + $0x10] sm:$0xf]
    %v126 = vld [vmem:[%s4 + $0x14] sm:$0xf]
    %v127 = vld [vmem:[%s4 + $0x18] sm:$0xf]
    %v128 = vld [vmem:[%s4 + $0x1c] sm:$0xf]
    %v129 = vld [vmem:[%s4 + $0x20] sm:$0xf]
    %v130 = vld [vmem:[%s4 + $0x24] sm:$0xf]
    %v131 = vld [vmem:[%s4 + $0x28] sm:$0xf]
    %v132 = vld [vmem:[%s4 + $0x2c] sm:$0xf]
    %v133 = vld [vmem:[%s4 + $0x30] sm:$0xf]
    %v134 = vld [vmem:[%s4 + $0x34] sm:$0xf]
    %v135 = vld [vmem:[%s4 + $0x38] sm:$0xf]
    %v136 = vld [vmem:[%s4 + $0x3c] sm:$0xf]
    %v137 = vld [vmem:[%s5] sm:$0x1]
    %v139 = vlaneseq
    %v140 = vshrl.u32 %v139, 7
    %v141 = vsub.s32 0, %v140
    %v142 = vrot.slane %v137, %v141
    %v160 = vunpack.c.l.b16 %v121
    %v161 = vunpack.c.l.b16 %v122
    %v162 = vunpack.c.l.b16 %v123
    %v163 = vunpack.c.l.b16 %v124
    %v164 = vunpack.c.l.b16 %v125
    %v165 = vunpack.c.l.b16 %v126
    %v166 = vunpack.c.l.b16 %v127
    %v167 = vunpack.c.l.b16 %v128
    %v168 = vunpack.c.l.b16 %v129
    %v169 = vunpack.c.l.b16 %v130
    %v170 = vunpack.c.l.b16 %v131
    %v171 = vunpack.c.l.b16 %v132
    %v172 = vunpack.c.l.b16 %v133
    %v173 = vunpack.c.l.b16 %v134
    %v174 = vunpack.c.l.b16 %v135
    %v175 = vunpack.c.l.b16 %v136
    %v176 = vpack.c.b16 %v161, %v160
    %v177 = vpack.c.b16 %v163, %v162
    %v178 = vpack.c.b16 %v165, %v164
    %v179 = vpack.c.b16 %v167, %v166
    %v180 = vpack.c.b16 %v169, %v168
    %v181 = vpack.c.b16 %v171, %v170
    %v182 = vpack.c.b16 %v173, %v172
    %v183 = vpack.c.b16 %v175, %v174
    %192 = vmatprep.subr.bf16.mxu0 0
    %193 = vmatpush1.bf16.msra.mxu0 %v176
    %194 = vmatprep.subr.bf16.mxu0 0
    %195 = vmatpush1.bf16.msra.mxu0 %v177
    %196 = vmatprep.subr.bf16.mxu0 0
    %197 = vmatpush1.bf16.msra.mxu0 %v178
    %198 = vmatprep.subr.bf16.mxu0 0
    %199 = vmatpush1.bf16.msra.mxu0 %v179
    %200 = vmatprep.subr.bf16.mxu0 0
    %201 = vmatpush1.bf16.msra.mxu0 %v180
    %202 = vmatprep.subr.bf16.mxu0 0
    %203 = vmatpush1.bf16.msra.mxu0 %v181
    %204 = vmatprep.subr.bf16.mxu0 0
    %205 = vmatpush1.bf16.msra.mxu0 %v182
    %206 = vmatprep.subr.bf16.mxu0 0
    %207 = vmatpush1.bf16.msra.mxu0 %v183
    %208 = vmatprep.subr.bf16.mxu0 0
    %209 = vmatpush1.bf16.msra.mxu0 0
    %210 = vmatprep.subr.bf16.mxu0 0
    %211 = vmatpush1.bf16.msra.mxu0 0
    %212 = vmatprep.subr.bf16.mxu0 0
    %213 = vmatpush1.bf16.msra.mxu0 0
    %214 = vmatprep.subr.bf16.mxu0 0
    %215 = vmatpush1.bf16.msra.mxu0 0
    %216 = vmatprep.subr.bf16.mxu0 0
    %217 = vmatpush1.bf16.msra.mxu0 0
    %218 = vmatprep.subr.bf16.mxu0 0
    %219 = vmatpush1.bf16.msra.mxu0 0
    %220 = vmatprep.subr.bf16.mxu0 0
    %221 = vmatpush1.bf16.msra.mxu0 0
    %222 = vmatprep.subr.bf16.mxu0 0
    %223 = vmatpush1.bf16.msra.mxu0 0
    %224 = vmatprep.mubr.bf16.mxu0 0
    %225 = vmatmul.mubr.bf16.gmra.mrb[0].mxu0 %v120
    %v226 = vpop.f32.mrb[0].mxu0
    %v227 = vadd.f32 %v142, %v226
    %v228 = vpop.f32.mrb[0].mxu0
    %v229 = vpop.f32.mrb[0].mxu0
    %v230 = vpop.f32.mrb[0].mxu0
    %231 = vdwg.mxu0
    %v232 = vmax.f32 %v227, 0.0
    %v233 = vpack.c.bf16 %v232, %v232
    %v234 = vld [vmem:[%s6] sm:$0xf]
    %v235 = vld [vmem:[%s6 + $0x4] sm:$0xf]
    %v236 = vld [vmem:[%s6 + $0x8] sm:$0xf]
    %v237 = vld [vmem:[%s6 + $0xc] sm:$0xf]
    %v238 = vld [vmem:[%s6 + $0x10] sm:$0xf]
    %v239 = vld [vmem:[%s6 + $0x14] sm:$0xf]
    %v240 = vld [vmem:[%s6 + $0x18] sm:$0xf]
    %v241 = vld [vmem:[%s6 + $0x1c] sm:$0xf]
    %v242 = vld [vmem:[%s6 + $0x20] sm:$0xf]
    %v243 = vld [vmem:[%s6 + $0x24] sm:$0xf]
    %v244 = vld [vmem:[%s6 + $0x28] sm:$0xf]
    %v245 = vld [vmem:[%s6 + $0x2c] sm:$0xf]
    %v246 = vld [vmem:[%s6 + $0x30] sm:$0xf]
    %v247 = vld [vmem:[%s6 + $0x34] sm:$0xf]
    %v248 = vld [vmem:[%s6 + $0x38] sm:$0xf]
    %v249 = vld [vmem:[%s6 + $0x3c] sm:$0xf]
    %v250 = vld [vmem:[%s8] sm:$0x1]
    %v252 = vlaneseq
    %v253 = vshrl.u32 %v252, 7
    %v254 = vsub.s32 0, %v253
    %v255 = vrot.slane %v250, %v254
    %v273 = vunpack.c.l.b16 %v234
    %v274 = vunpack.c.l.b16 %v235
    %v275 = vunpack.c.l.b16 %v236
    %v276 = vunpack.c.l.b16 %v237
    %v277 = vunpack.c.l.b16 %v238
    %v278 = vunpack.c.l.b16 %v239
    %v279 = vunpack.c.l.b16 %v240
    %v280 = vunpack.c.l.b16 %v241
    %v281 = vunpack.c.l.b16 %v242
    %v282 = vunpack.c.l.b16 %v243
    %v283 = vunpack.c.l.b16 %v244
    %v284 = vunpack.c.l.b16 %v245
    %v285 = vunpack.c.l.b16 %v246
    %v286 = vunpack.c.l.b16 %v247
    %v287 = vunpack.c.l.b16 %v248
    %v288 = vunpack.c.l.b16 %v249
    %v289 = vpack.c.b16 %v274, %v273
    %v290 = vpack.c.b16 %v276, %v275
    %v291 = vpack.c.b16 %v278, %v277
    %v292 = vpack.c.b16 %v280, %v279
    %v293 = vpack.c.b16 %v282, %v281
    %v294 = vpack.c.b16 %v284, %v283
    %v295 = vpack.c.b16 %v286, %v285
    %v296 = vpack.c.b16 %v288, %v287
    %305 = vmatprep.subr.bf16.mxu0 0
    %306 = vmatpush1.bf16.msra.mxu0 %v289
    %307 = vmatprep.subr.bf16.mxu0 0
    %308 = vmatpush1.bf16.msra.mxu0 %v290
    %309 = vmatprep.subr.bf16.mxu0 0
    %310 = vmatpush1.bf16.msra.mxu0 %v291
    %311 = vmatprep.subr.bf16.mxu0 0
    %312 = vmatpush1.bf16.msra.mxu0 %v292
    %313 = vmatprep.subr.bf16.mxu0 0
    %314 = vmatpush1.bf16.msra.mxu0 %v293
    %315 = vmatprep.subr.bf16.mxu0 0
    %316 = vmatpush1.bf16.msra.mxu0 %v294
    %317 = vmatprep.subr.bf16.mxu0 0
    %318 = vmatpush1.bf16.msra.mxu0 %v295
    %319 = vmatprep.subr.bf16.mxu0 0
    %320 = vmatpush1.bf16.msra.mxu0 %v296
    %321 = vmatprep.subr.bf16.mxu0 0
    %322 = vmatpush1.bf16.msra.mxu0 0
    %323 = vmatprep.subr.bf16.mxu0 0
    %324 = vmatpush1.bf16.msra.mxu0 0
    %325 = vmatprep.subr.bf16.mxu0 0
    %326 = vmatpush1.bf16.msra.mxu0 0
    %327 = vmatprep.subr.bf16.mxu0 0
    %328 = vmatpush1.bf16.msra.mxu0 0
    %329 = vmatprep.subr.bf16.mxu0 0
    %330 = vmatpush1.bf16.msra.mxu0 0
    %331 = vmatprep.subr.bf16.mxu0 0
    %332 = vmatpush1.bf16.msra.mxu0 0
    %333 = vmatprep.subr.bf16.mxu0 0
    %334 = vmatpush1.bf16.msra.mxu0 0
    %335 = vmatprep.subr.bf16.mxu0 0
    %336 = vmatpush1.bf16.msra.mxu0 0
    %337 = vmatprep.mubr.bf16.mxu0 0
    %338 = vmatmul.mubr.bf16.gmra.mrb[0].mxu0 %v233
    %v339 = vpop.f32.mrb[0].mxu0
    %v340 = vadd.f32 %v255, %v339
    %v341 = vpop.f32.mrb[0].mxu0
    %v342 = vpop.f32.mrb[0].mxu0
    %v343 = vpop.f32.mrb[0].mxu0
    %344 = vdwg.mxu0
    %v345 = vld [vmem:[%s7] sm:$0xf]
    %347 = vset.pattern.permute.xlu0 0
    %348 = vperm.xlu0 %347, %v58
    %v349 = vpop.permute.xlu0 %348
    %v351 = vlaneseq
    %v352 = vshrl.u32 %v351, 7
    %v353 = vsub.s32 0, %v352
    %v354 = vrot.slane %v345, %v353
    %v355 = vmul.f32 %v349, %v354
    %v356 = vadd.f32 %v340, %v355
    %357 = vset.pattern.permute.xlu0 1
    %358 = vperm.xlu0 %357, %v58
    %v359 = vpop.permute.xlu0 %358
    %v361 = vlaneseq
    %v362 = vshrl.u32 %v361, 7
    %v363 = vsub.s32 1, %v362
    %v364 = vrot.slane %v345, %v363
    %v365 = vmul.f32 %v359, %v364
    %v366 = vadd.f32 %v356, %v365
    %367 = vset.pattern.permute.xlu0 2
    %368 = vperm.xlu0 %367, %v58
    %v369 = vpop.permute.xlu0 %368
    %v371 = vlaneseq
    %v372 = vshrl.u32 %v371, 7
    %v373 = vsub.s32 2, %v372
    %v374 = vrot.slane %v345, %v373
    %v375 = vmul.f32 %v369, %v374
    %v376 = vadd.f32 %v366, %v375
    %377 = vset.pattern.permute.xlu0 3
    %378 = vperm.xlu0 %377, %v58
    %v379 = vpop.permute.xlu0 %378
    %v381 = vlaneseq
    %v382 = vshrl.u32 %v381, 7
    %v383 = vsub.s32 3, %v382
    %v384 = vrot.slane %v345, %v383
    %v385 = vmul.f32 %v379, %v384
    %v386 = vadd.f32 %v376, %v385
    %v387 = vmax.f32 %v386, 0.0
    %v388 = vpack.c.bf16 %v387, %v387
    %v389 = vld [vmem:[%s9] sm:$0xf]
    %v390 = vld [vmem:[%s9 + $0x4] sm:$0xf]
    %v391 = vld [vmem:[%s9 + $0x8] sm:$0xf]
    %v392 = vld [vmem:[%s9 + $0xc] sm:$0xf]
    %v393 = vld [vmem:[%s9 + $0x10] sm:$0xf]
    %v394 = vld [vmem:[%s9 + $0x14] sm:$0xf]
    %v395 = vld [vmem:[%s9 + $0x18] sm:$0xf]
    %v396 = vld [vmem:[%s9 + $0x1c] sm:$0xf]
    %v397 = vld [vmem:[%s10] sm:$0x1]
    %v399 = vlaneseq
    %v400 = vshrl.u32 %v399, 7
    %v401 = vsub.s32 0, %v400
    %v402 = vrot.slane %v397, %v401
    %v412 = vunpack.c.l.b16 %v389
    %v413 = vunpack.c.l.b16 %v390
    %v414 = vunpack.c.l.b16 %v391
    %v415 = vunpack.c.l.b16 %v392
    %v416 = vunpack.c.l.b16 %v393
    %v417 = vunpack.c.l.b16 %v394
    %v418 = vunpack.c.l.b16 %v395
    %v419 = vunpack.c.l.b16 %v396
    %v420 = vpack.c.b16 %v413, %v412
    %v421 = vpack.c.b16 %v415, %v414
    %v422 = vpack.c.b16 %v417, %v416
    %v423 = vpack.c.b16 %v419, %v418
    %vm428 = vcmask 523264
    %v430 = vsel %vm428, %v388, 0
    %432 = vmatprep.subr.bf16.mxu0 0
    %433 = vmatpush1.bf16.msra.mxu0 %v420
    %434 = vmatprep.subr.bf16.mxu0 0
    %435 = vmatpush1.bf16.msra.mxu0 %v421
    %436 = vmatprep.subr.bf16.mxu0 0
    %437 = vmatpush1.bf16.msra.mxu0 %v422
    %438 = vmatprep.subr.bf16.mxu0 0
    %439 = vmatpush1.bf16.msra.mxu0 %v423
    %440 = vmatprep.subr.bf16.mxu0 0
    %441 = vmatpush1.bf16.msra.mxu0 0
    %442 = vmatprep.subr.bf16.mxu0 0
    %443 = vmatpush1.bf16.msra.mxu0 0
    %444 = vmatprep.subr.bf16.mxu0 0
    %445 = vmatpush1.bf16.msra.mxu0 0
    %446 = vmatprep.subr.bf16.mxu0 0
    %447 = vmatpush1.bf16.msra.mxu0 0
    %448 = vmatprep.subr.bf16.mxu0 0
    %449 = vmatpush1.bf16.msra.mxu0 0
    %450 = vmatprep.subr.bf16.mxu0 0
    %451 = vmatpush1.bf16.msra.mxu0 0
    %452 = vmatprep.subr.bf16.mxu0 0
    %453 = vmatpush1.bf16.msra.mxu0 0
    %454 = vmatprep.subr.bf16.mxu0 0
    %455 = vmatpush1.bf16.msra.mxu0 0
    %456 = vmatprep.subr.bf16.mxu0 0
    %457 = vmatpush1.bf16.msra.mxu0 0
    %458 = vmatprep.subr.bf16.mxu0 0
    %459 = vmatpush1.bf16.msra.mxu0 0
    %460 = vmatprep.subr.bf16.mxu0 0
    %461 = vmatpush1.bf16.msra.mxu0 0
    %462 = vmatprep.subr.bf16.mxu0 0
    %463 = vmatpush1.bf16.msra.mxu0 0
    %464 = vmatprep.mubr.bf16.mxu0 0
    %465 = vmatmul.mubr.bf16.gmra.mrb[0].mxu0 %v430
    %v466 = vpop.f32.mrb[0].mxu0
    %v467 = vadd.f32 %v402, %v466
    %v468 = vpop.f32.mrb[0].mxu0
    %v469 = vpop.f32.mrb[0].mxu0
    %v470 = vpop.f32.mrb[0].mxu0
    %471 = vdwg.mxu0
    %v472 = vmax.f32 %v467, 0.0
    %v473 = vld [vmem:[%s11] sm:$0x1]
    %v475 = vlaneseq
    %v476 = vshrl.u32 %v475, 7
    %v477 = vsub.s32 0, %v476
    %v478 = vrot.slane %v473, %v477
    %v480 = vmul.f32 %v472, %v478
    %vm481 = vcmask 257024
    %v482 = vsel %vm481, %v480, 0.0
    %483 = vadd.xlane.f32.xlu0 %v482
    %v484 = vpop.xlane.xlu0 %483
    %486 = vrot.lane.b32.xlu0 %v480, 96
    %v487 = vpop.permute.xlu0 %486
    %v489 = vsel %vm481, %v487, 0.0
    %490 = vadd.xlane.f32.xlu0 %v489
    %v491 = vpop.xlane.xlu0 %490
    %vm492 = vcmask 7168
    %v493 = vsel %vm492, %v484, %v491
    %v494 = vld [vmem:[%s12] sm:$0x1]
    %v496 = vlaneseq
    %v497 = vshrl.u32 %v496, 7
    %v498 = vsub.s32 0, %v497
    %v499 = vrot.slane %v494, %v498
    %v501 = vadd.f32 %v493, %v499
    %vm502 = vcmask 11264
    %503 = vst.msk [vmem:[%s13] sm:$0xf] %vm502, %v501
    // Predicated region
    $region58: #{tpu_custom_call.1} parent=1 // pred_check
      _
    $region59: #{tpu_custom_call.1} parent=1 // pred_check_branch
      %505 = sbr.rel (0) target = $region61
    $region60: #{tpu_custom_call.1} parent=1 // pred_region
      _
    $region61: #{tpu_custom_call.1} parent=1 // pred_fallthru
      _
    // Predicated region
    $region62: #{tpu_custom_call.1} parent=1 // pred_check
      _
    $region63: #{tpu_custom_call.1} parent=1 // pred_check_branch
      %507 = sbr.rel (0) target = $region65
    $region64: #{tpu_custom_call.1} parent=1 // pred_region
      _
    $region65: #{tpu_custom_call.1} parent=1 // pred_fallthru
      _
    %508 = vsyncpa [#allocation3], 1

// kernel: tpu_custom_call.1
$region0: #{tpu_custom_call.1}
  #allocation0 [shape = 'u32[]', space=smem, size = 0x4, offset = 0x4, fixed_abs, tag = 'smem constant byte address 0x4 - core index']
  #allocation1 [shape = 'u32[144,128]{1,0:T(1,128)}', space=vmem, size = 0x12000, scoped, tag = 'internal scratch']
  %s0 = inlined_call_operand.vmem [shape: f32[4,16], index: 0, kind: input, shape index: {}]
  %s1 = inlined_call_operand.hbm [shape: f32[4,4], index: 1, kind: input, shape index: {}]
  %s2 = inlined_call_operand.vmem [shape: bf16[16,128], index: 2, kind: input, shape index: {}]
  %s3 = inlined_call_operand.vmem [shape: f32[1,128], index: 3, kind: input, shape index: {}]
  %s4 = inlined_call_operand.vmem [shape: bf16[128,128], index: 4, kind: input, shape index: {}]
  %s5 = inlined_call_operand.vmem [shape: f32[1,128], index: 5, kind: input, shape index: {}]
  %s6 = inlined_call_operand.vmem [shape: bf16[128,64], index: 6, kind: input, shape index: {}]
  %s7 = inlined_call_operand.vmem [shape: f32[4,64], index: 7, kind: input, shape index: {}]
  %s8 = inlined_call_operand.vmem [shape: f32[1,64], index: 8, kind: input, shape index: {}]
  %s9 = inlined_call_operand.vmem [shape: bf16[64,64], index: 9, kind: input, shape index: {}]
  %s10 = inlined_call_operand.vmem [shape: f32[1,64], index: 10, kind: input, shape index: {}]
  %s11 = inlined_call_operand.vmem [shape: f32[1,64], index: 11, kind: input, shape index: {}]
  %s12 = inlined_call_operand.vmem [shape: f32[1,2], index: 12, kind: input, shape index: {}]
  %s13 = inlined_call_operand.vmem [shape: f32[4,2], index: 13, kind: output, shape index: {}]
  %s14 = sld [smem:[#allocation0]]
  $region66: #{tpu_custom_call.1} parent=0
    _
  %s16 = ssub.s32 1, %s14
  %s17 = scalar_select 0, %s16, %s14
  $region1: #{tpu_custom_call.1} parent=0
    #allocation2 [shape = 'u8[2048]{0}', space=vmem, size = 0x800, scoped, tag = 'input window, operand 1, single buffered']
    #allocation3 [shape = 's32[1]{0}', space=sflag, size = 0x4, scoped, tag = 'scoped memory for tpu_custom_call.1']
    %18 = vsyncpa [#allocation3], 0
    // Predicated region
    $region2: #{tpu_custom_call.1} parent=1 // pred_check
      _
    $region3: #{tpu_custom_call.1} parent=1 // pred_check_branch
      %20 = sbr.rel (0) target = $region5
    $region4: #{tpu_custom_call.1} parent=1 // pred_region
      _
    $region5: #{tpu_custom_call.1} parent=1 // pred_fallthru
      _
    // Predicated region
    $region6: #{tpu_custom_call.1} parent=1 // pred_check
      _
    $region7: #{tpu_custom_call.1} parent=1 // pred_check_branch
      %22 = sbr.rel (0) target = $region9
    $region8: #{tpu_custom_call.1} parent=1 // pred_region
      %s24 = ssub.s32 64, 64
      %25 = vsyncadd [#allocation3], %s24
      %s27 = sshll.u32 [#allocation2], 4
      %s28 = int_to_ptr.vmem [resolvable:$true] %s27
      %30 = dma.hbm_to_vmem [thread:$0]  %s1, 64, %s28, [#allocation3]
    $region9: #{tpu_custom_call.1} parent=1 // pred_fallthru
      _
    // Predicated region
    $region10: #{tpu_custom_call.1} parent=1 // pred_check
      _
    $region11: #{tpu_custom_call.1} parent=1 // pred_check_branch
      %32 = sbr.rel (0) target = $region13
    $region12: #{tpu_custom_call.1} parent=1 // pred_region
      _
    $region13: #{tpu_custom_call.1} parent=1 // pred_fallthru
      _
    // Predicated region
    $region14: #{tpu_custom_call.1} parent=1 // pred_check
      _
    $region15: #{tpu_custom_call.1} parent=1 // pred_check_branch
      %34 = sbr.rel (0) target = $region17
    $region16: #{tpu_custom_call.1} parent=1 // pred_region
      _
    $region17: #{tpu_custom_call.1} parent=1 // pred_fallthru
      _
    // Predicated region
    $region18: #{tpu_custom_call.1} parent=1 // pred_check
      _
    $region19: #{tpu_custom_call.1} parent=1 // pred_check_branch
      %36 = sbr.rel (0) target = $region21
    $region20: #{tpu_custom_call.1} parent=1 // pred_region
      _
    $region21: #{tpu_custom_call.1} parent=1 // pred_fallthru
      _
    // Predicated region
    $region22: #{tpu_custom_call.1} parent=1 // pred_check
      _
    $region23: #{tpu_custom_call.1} parent=1 // pred_check_branch
      %38 = sbr.rel (0) target = $region25
    $region24: #{tpu_custom_call.1} parent=1 // pred_region
      _
    $region25: #{tpu_custom_call.1} parent=1 // pred_fallthru
      _
    // Predicated region
    $region26: #{tpu_custom_call.1} parent=1 // pred_check
      _
    $region27: #{tpu_custom_call.1} parent=1 // pred_check_branch
      %40 = sbr.rel (0) target = $region29
    $region28: #{tpu_custom_call.1} parent=1 // pred_region
      _
    $region29: #{tpu_custom_call.1} parent=1 // pred_fallthru
      _
    // Predicated region
    $region30: #{tpu_custom_call.1} parent=1 // pred_check
      _
    $region31: #{tpu_custom_call.1} parent=1 // pred_check_branch
      %42 = sbr.rel (0) target = $region33
    $region32: #{tpu_custom_call.1} parent=1 // pred_region
      _
    $region33: #{tpu_custom_call.1} parent=1 // pred_fallthru
      _
    // Predicated region
    $region34: #{tpu_custom_call.1} parent=1 // pred_check
      _
    $region35: #{tpu_custom_call.1} parent=1 // pred_check_branch
      %44 = sbr.rel (0) target = $region37
    $region36: #{tpu_custom_call.1} parent=1 // pred_region
      _
    $region37: #{tpu_custom_call.1} parent=1 // pred_fallthru
      _
    // Predicated region
    $region38: #{tpu_custom_call.1} parent=1 // pred_check
      _
    $region39: #{tpu_custom_call.1} parent=1 // pred_check_branch
      %46 = sbr.rel (0) target = $region41
    $region40: #{tpu_custom_call.1} parent=1 // pred_region
      _
    $region41: #{tpu_custom_call.1} parent=1 // pred_fallthru
      _
    // Predicated region
    $region42: #{tpu_custom_call.1} parent=1 // pred_check
      _
    $region43: #{tpu_custom_call.1} parent=1 // pred_check_branch
      %48 = sbr.rel (0) target = $region45
    $region44: #{tpu_custom_call.1} parent=1 // pred_region
      _
    $region45: #{tpu_custom_call.1} parent=1 // pred_fallthru
      _
    // Predicated region
    $region46: #{tpu_custom_call.1} parent=1 // pred_check
      _
    $region47: #{tpu_custom_call.1} parent=1 // pred_check_branch
      %50 = sbr.rel (0) target = $region49
    $region48: #{tpu_custom_call.1} parent=1 // pred_region
      _
    $region49: #{tpu_custom_call.1} parent=1 // pred_fallthru
      _
    // Predicated region
    $region50: #{tpu_custom_call.1} parent=1 // pred_check
      _
    $region51: #{tpu_custom_call.1} parent=1 // pred_check_branch
      %52 = sbr.rel (0) target = $region53
    $region52: #{tpu_custom_call.1} parent=1 // pred_region
      _
    $region53: #{tpu_custom_call.1} parent=1 // pred_fallthru
      _
    // Predicated region
    $region54: #{tpu_custom_call.1} parent=1 // pred_check
      _
    $region55: #{tpu_custom_call.1} parent=1 // pred_check_branch
      %54 = sbr.rel (0) target = $region57
    $region56: #{tpu_custom_call.1} parent=1 // pred_region
      %55 = dma.done [#allocation3], 64
    $region57: #{tpu_custom_call.1} parent=1 // pred_fallthru
      _
    %v57 = vld [vmem:[%s0] sm:$0xf]
    %v58 = vld [vmem:[#allocation2] sm:$0xf]
    %v59 = vpack.c.bf16 %v57, %v57
    %v60 = vld [vmem:[%s2] sm:$0xf]
    %v61 = vld [vmem:[%s2 + $0x4] sm:$0xf]
    %v62 = vld [vmem:[%s3] sm:$0x1]
    %v64 = vlaneseq
    %v65 = vshrl.u32 %v64, 7
    %v66 = vsub.s32 0, %v65
    %v67 = vrot.slane %v62, %v66
    %v71 = vunpack.c.l.b16 %v60
    %v72 = vunpack.c.l.b16 %v61
    %v73 = vpack.c.b16 %v72, %v71
    %vm75 = vcmask 130048
    %v77 = vsel %vm75, %v59, 0
    %79 = vmatprep.subr.bf16.mxu0 0
    %80 = vmatpush1.bf16.msra.mxu0 %v73
    %81 = vmatprep.subr.bf16.mxu0 0
    %82 = vmatpush1.bf16.msra.mxu0 0
    %83 = vmatprep.subr.bf16.mxu0 0
    %84 = vmatpush1.bf16.msra.mxu0 0
    %85 = vmatprep.subr.bf16.mxu0 0
    %86 = vmatpush1.bf16.msra.mxu0 0
    %87 = vmatprep.subr.bf16.mxu0 0
    %88 = vmatpush1.bf16.msra.mxu0 0
    %89 = vmatprep.subr.bf16.mxu0 0
    %90 = vmatpush1.bf16.msra.mxu0 0
    %91 = vmatprep.subr.bf16.mxu0 0
    %92 = vmatpush1.bf16.msra.mxu0 0
    %93 = vmatprep.subr.bf16.mxu0 0
    %94 = vmatpush1.bf16.msra.mxu0 0
    %95 = vmatprep.subr.bf16.mxu0 0
    %96 = vmatpush1.bf16.msra.mxu0 0
    %97 = vmatprep.subr.bf16.mxu0 0
    %98 = vmatpush1.bf16.msra.mxu0 0
    %99 = vmatprep.subr.bf16.mxu0 0
    %100 = vmatpush1.bf16.msra.mxu0 0
    %101 = vmatprep.subr.bf16.mxu0 0
    %102 = vmatpush1.bf16.msra.mxu0 0
    %103 = vmatprep.subr.bf16.mxu0 0
    %104 = vmatpush1.bf16.msra.mxu0 0
    %105 = vmatprep.subr.bf16.mxu0 0
    %106 = vmatpush1.bf16.msra.mxu0 0
    %107 = vmatprep.subr.bf16.mxu0 0
    %108 = vmatpush1.bf16.msra.mxu0 0
    %109 = vmatprep.subr.bf16.mxu0 0
    %110 = vmatpush1.bf16.msra.mxu0 0
    %111 = vmatprep.mubr.bf16.mxu0 0
    %112 = vmatmul.mubr.bf16.gmra.mrb[0].mxu0 %v77
    %v113 = vpop.f32.mrb[0].mxu0
    %v114 = vadd.f32 %v67, %v113
    %v115 = vpop.f32.mrb[0].mxu0
    %v116 = vpop.f32.mrb[0].mxu0
    %v117 = vpop.f32.mrb[0].mxu0
    %118 = vdwg.mxu0
    %v119 = vmax.f32 %v114, 0.0
    %v120 = vpack.c.bf16 %v119, %v119
    %v121 = vld [vmem:[%s4] sm:$0xf]
    %v122 = vld [vmem:[%s4 + $0x4] sm:$0xf]
    %v123 = vld [vmem:[%s4 + $0x8] sm:$0xf]
    %v124 = vld [vmem:[%s4 + $0xc] sm:$0xf]
    %v125 = vld [vmem:[%s4 + $0x10] sm:$0xf]
    %v126 = vld [vmem:[%s4 + $0x14] sm:$0xf]
    %v127 = vld [vmem:[%s4 + $0x18] sm:$0xf]
    %v128 = vld [vmem:[%s4 + $0x1c] sm:$0xf]
    %v129 = vld [vmem:[%s4 + $0x20] sm:$0xf]
    %v130 = vld [vmem:[%s4 + $0x24] sm:$0xf]
    %v131 = vld [vmem:[%s4 + $0x28] sm:$0xf]
    %v132 = vld [vmem:[%s4 + $0x2c] sm:$0xf]
    %v133 = vld [vmem:[%s4 + $0x30] sm:$0xf]
    %v134 = vld [vmem:[%s4 + $0x34] sm:$0xf]
    %v135 = vld [vmem:[%s4 + $0x38] sm:$0xf]
    %v136 = vld [vmem:[%s4 + $0x3c] sm:$0xf]
    %v137 = vld [vmem:[%s5] sm:$0x1]
    %v139 = vlaneseq
    %v140 = vshrl.u32 %v139, 7
    %v141 = vsub.s32 0, %v140
    %v142 = vrot.slane %v137, %v141
    %v160 = vunpack.c.l.b16 %v121
    %v161 = vunpack.c.l.b16 %v122
    %v162 = vunpack.c.l.b16 %v123
    %v163 = vunpack.c.l.b16 %v124
    %v164 = vunpack.c.l.b16 %v125
    %v165 = vunpack.c.l.b16 %v126
    %v166 = vunpack.c.l.b16 %v127
    %v167 = vunpack.c.l.b16 %v128
    %v168 = vunpack.c.l.b16 %v129
    %v169 = vunpack.c.l.b16 %v130
    %v170 = vunpack.c.l.b16 %v131
    %v171 = vunpack.c.l.b16 %v132
    %v172 = vunpack.c.l.b16 %v133
    %v173 = vunpack.c.l.b16 %v134
    %v174 = vunpack.c.l.b16 %v135
    %v175 = vunpack.c.l.b16 %v136
    %v176 = vpack.c.b16 %v161, %v160
    %v177 = vpack.c.b16 %v163, %v162
    %v178 = vpack.c.b16 %v165, %v164
    %v179 = vpack.c.b16 %v167, %v166
    %v180 = vpack.c.b16 %v169, %v168
    %v181 = vpack.c.b16 %v171, %v170
    %v182 = vpack.c.b16 %v173, %v172
    %v183 = vpack.c.b16 %v175, %v174
    %192 = vmatprep.subr.bf16.mxu0 0
    %193 = vmatpush1.bf16.msra.mxu0 %v176
    %194 = vmatprep.subr.bf16.mxu0 0
    %195 = vmatpush1.bf16.msra.mxu0 %v177
    %196 = vmatprep.subr.bf16.mxu0 0
    %197 = vmatpush1.bf16.msra.mxu0 %v178
    %198 = vmatprep.subr.bf16.mxu0 0
    %199 = vmatpush1.bf16.msra.mxu0 %v179
    %200 = vmatprep.subr.bf16.mxu0 0
    %201 = vmatpush1.bf16.msra.mxu0 %v180
    %202 = vmatprep.subr.bf16.mxu0 0
    %203 = vmatpush1.bf16.msra.mxu0 %v181
    %204 = vmatprep.subr.bf16.mxu0 0
    %205 = vmatpush1.bf16.msra.mxu0 %v182
    %206 = vmatprep.subr.bf16.mxu0 0
    %207 = vmatpush1.bf16.msra.mxu0 %v183
    %208 = vmatprep.subr.bf16.mxu0 0
    %209 = vmatpush1.bf16.msra.mxu0 0
    %210 = vmatprep.subr.bf16.mxu0 0
    %211 = vmatpush1.bf16.msra.mxu0 0
    %212 = vmatprep.subr.bf16.mxu0 0
    %213 = vmatpush1.bf16.msra.mxu0 0
    %214 = vmatprep.subr.bf16.mxu0 0
    %215 = vmatpush1.bf16.msra.mxu0 0
    %216 = vmatprep.subr.bf16.mxu0 0
    %217 = vmatpush1.bf16.msra.mxu0 0
    %218 = vmatprep.subr.bf16.mxu0 0
    %219 = vmatpush1.bf16.msra.mxu0 0
    %220 = vmatprep.subr.bf16.mxu0 0
    %221 = vmatpush1.bf16.msra.mxu0 0
    %222 = vmatprep.subr.bf16.mxu0 0
    %223 = vmatpush1.bf16.msra.mxu0 0
    %224 = vmatprep.mubr.bf16.mxu0 0
    %225 = vmatmul.mubr.bf16.gmra.mrb[0].mxu0 %v120
    %v226 = vpop.f32.mrb[0].mxu0
    %v227 = vadd.f32 %v142, %v226
    %v228 = vpop.f32.mrb[0].mxu0
    %v229 = vpop.f32.mrb[0].mxu0
    %v230 = vpop.f32.mrb[0].mxu0
    %231 = vdwg.mxu0
    %v232 = vmax.f32 %v227, 0.0
    %v233 = vpack.c.bf16 %v232, %v232
    %v234 = vld [vmem:[%s6] sm:$0xf]
    %v235 = vld [vmem:[%s6 + $0x4] sm:$0xf]
    %v236 = vld [vmem:[%s6 + $0x8] sm:$0xf]
    %v237 = vld [vmem:[%s6 + $0xc] sm:$0xf]
    %v238 = vld [vmem:[%s6 + $0x10] sm:$0xf]
    %v239 = vld [vmem:[%s6 + $0x14] sm:$0xf]
    %v240 = vld [vmem:[%s6 + $0x18] sm:$0xf]
    %v241 = vld [vmem:[%s6 + $0x1c] sm:$0xf]
    %v242 = vld [vmem:[%s6 + $0x20] sm:$0xf]
    %v243 = vld [vmem:[%s6 + $0x24] sm:$0xf]
    %v244 = vld [vmem:[%s6 + $0x28] sm:$0xf]
    %v245 = vld [vmem:[%s6 + $0x2c] sm:$0xf]
    %v246 = vld [vmem:[%s6 + $0x30] sm:$0xf]
    %v247 = vld [vmem:[%s6 + $0x34] sm:$0xf]
    %v248 = vld [vmem:[%s6 + $0x38] sm:$0xf]
    %v249 = vld [vmem:[%s6 + $0x3c] sm:$0xf]
    %v250 = vld [vmem:[%s8] sm:$0x1]
    %v252 = vlaneseq
    %v253 = vshrl.u32 %v252, 7
    %v254 = vsub.s32 0, %v253
    %v255 = vrot.slane %v250, %v254
    %v273 = vunpack.c.l.b16 %v234
    %v274 = vunpack.c.l.b16 %v235
    %v275 = vunpack.c.l.b16 %v236
    %v276 = vunpack.c.l.b16 %v237
    %v277 = vunpack.c.l.b16 %v238
    %v278 = vunpack.c.l.b16 %v239
    %v279 = vunpack.c.l.b16 %v240
    %v280 = vunpack.c.l.b16 %v241
    %v281 = vunpack.c.l.b16 %v242
    %v282 = vunpack.c.l.b16 %v243
    %v283 = vunpack.c.l.b16 %v244
    %v284 = vunpack.c.l.b16 %v245
    %v285 = vunpack.c.l.b16 %v246
    %v286 = vunpack.c.l.b16 %v247
    %v287 = vunpack.c.l.b16 %v248
    %v288 = vunpack.c.l.b16 %v249
    %v289 = vpack.c.b16 %v274, %v273
    %v290 = vpack.c.b16 %v276, %v275
    %v291 = vpack.c.b16 %v278, %v277
    %v292 = vpack.c.b16 %v280, %v279
    %v293 = vpack.c.b16 %v282, %v281
    %v294 = vpack.c.b16 %v284, %v283
    %v295 = vpack.c.b16 %v286, %v285
    %v296 = vpack.c.b16 %v288, %v287
    %305 = vmatprep.subr.bf16.mxu0 0
    %306 = vmatpush1.bf16.msra.mxu0 %v289
    %307 = vmatprep.subr.bf16.mxu0 0
    %308 = vmatpush1.bf16.msra.mxu0 %v290
    %309 = vmatprep.subr.bf16.mxu0 0
    %310 = vmatpush1.bf16.msra.mxu0 %v291
    %311 = vmatprep.subr.bf16.mxu0 0
    %312 = vmatpush1.bf16.msra.mxu0 %v292
    %313 = vmatprep.subr.bf16.mxu0 0
    %314 = vmatpush1.bf16.msra.mxu0 %v293
    %315 = vmatprep.subr.bf16.mxu0 0
    %316 = vmatpush1.bf16.msra.mxu0 %v294
    %317 = vmatprep.subr.bf16.mxu0 0
    %318 = vmatpush1.bf16.msra.mxu0 %v295
    %319 = vmatprep.subr.bf16.mxu0 0
    %320 = vmatpush1.bf16.msra.mxu0 %v296
    %321 = vmatprep.subr.bf16.mxu0 0
    %322 = vmatpush1.bf16.msra.mxu0 0
    %323 = vmatprep.subr.bf16.mxu0 0
    %324 = vmatpush1.bf16.msra.mxu0 0
    %325 = vmatprep.subr.bf16.mxu0 0
    %326 = vmatpush1.bf16.msra.mxu0 0
    %327 = vmatprep.subr.bf16.mxu0 0
    %328 = vmatpush1.bf16.msra.mxu0 0
    %329 = vmatprep.subr.bf16.mxu0 0
    %330 = vmatpush1.bf16.msra.mxu0 0
    %331 = vmatprep.subr.bf16.mxu0 0
    %332 = vmatpush1.bf16.msra.mxu0 0
    %333 = vmatprep.subr.bf16.mxu0 0
    %334 = vmatpush1.bf16.msra.mxu0 0
    %335 = vmatprep.subr.bf16.mxu0 0
    %336 = vmatpush1.bf16.msra.mxu0 0
    %337 = vmatprep.mubr.bf16.mxu0 0
    %338 = vmatmul.mubr.bf16.gmra.mrb[0].mxu0 %v233
    %v339 = vpop.f32.mrb[0].mxu0
    %v340 = vadd.f32 %v255, %v339
    %v341 = vpop.f32.mrb[0].mxu0
    %v342 = vpop.f32.mrb[0].mxu0
    %v343 = vpop.f32.mrb[0].mxu0
    %344 = vdwg.mxu0
    %v345 = vld [vmem:[%s7] sm:$0xf]
    %347 = vset.pattern.permute.xlu0 0
    %348 = vperm.xlu0 %347, %v58
    %v349 = vpop.permute.xlu0 %348
    %v351 = vlaneseq
    %v352 = vshrl.u32 %v351, 7
    %v353 = vsub.s32 0, %v352
    %v354 = vrot.slane %v345, %v353
    %v355 = vmul.f32 %v349, %v354
    %v356 = vadd.f32 %v340, %v355
    %357 = vset.pattern.permute.xlu0 1
    %358 = vperm.xlu0 %357, %v58
    %v359 = vpop.permute.xlu0 %358
    %v361 = vlaneseq
    %v362 = vshrl.u32 %v361, 7
    %v363 = vsub.s32 1, %v362
    %v364 = vrot.slane %v345, %v363
    %v365 = vmul.f32 %v359, %v364
    %v366 = vadd.f32 %v356, %v365
    %367 = vset.pattern.permute.xlu0 2
    %368 = vperm.xlu0 %367, %v58
    %v369 = vpop.permute.xlu0 %368
    %v371 = vlaneseq
    %v372 = vshrl.u32 %v371, 7
    %v373 = vsub.s32 2, %v372
    %v374 = vrot.slane %v345, %v373
    %v375 = vmul.f32 %v369, %v374
    %v376 = vadd.f32 %v366, %v375
    %377 = vset.pattern.permute.xlu0 3
    %378 = vperm.xlu0 %377, %v58
    %v379 = vpop.permute.xlu0 %378
    %v381 = vlaneseq
    %v382 = vshrl.u32 %v381, 7
    %v383 = vsub.s32 3, %v382
    %v384 = vrot.slane %v345, %v383
    %v385 = vmul.f32 %v379, %v384
    %v386 = vadd.f32 %v376, %v385
    %v387 = vmax.f32 %v386, 0.0
    %v388 = vpack.c.bf16 %v387, %v387
    %v389 = vld [vmem:[%s9] sm:$0xf]
    %v390 = vld [vmem:[%s9 + $0x4] sm:$0xf]
    %v391 = vld [vmem:[%s9 + $0x8] sm:$0xf]
    %v392 = vld [vmem:[%s9 + $0xc] sm:$0xf]
    %v393 = vld [vmem:[%s9 + $0x10] sm:$0xf]
    %v394 = vld [vmem:[%s9 + $0x14] sm:$0xf]
    %v395 = vld [vmem:[%s9 + $0x18] sm:$0xf]
    %v396 = vld [vmem:[%s9 + $0x1c] sm:$0xf]
    %v397 = vld [vmem:[%s10] sm:$0x1]
    %v399 = vlaneseq
    %v400 = vshrl.u32 %v399, 7
    %v401 = vsub.s32 0, %v400
    %v402 = vrot.slane %v397, %v401
    %v412 = vunpack.c.l.b16 %v389
    %v413 = vunpack.c.l.b16 %v390
    %v414 = vunpack.c.l.b16 %v391
    %v415 = vunpack.c.l.b16 %v392
    %v416 = vunpack.c.l.b16 %v393
    %v417 = vunpack.c.l.b16 %v394
    %v418 = vunpack.c.l.b16 %v395
    %v419 = vunpack.c.l.b16 %v396
    %v420 = vpack.c.b16 %v413, %v412
    %v421 = vpack.c.b16 %v415, %v414
    %v422 = vpack.c.b16 %v417, %v416
    %v423 = vpack.c.b16 %v419, %v418
    %vm428 = vcmask 523264
    %v430 = vsel %vm428, %v388, 0
    %432 = vmatprep.subr.bf16.mxu0 0
    %433 = vmatpush1.bf16.msra.mxu0 %v420
    %434 = vmatprep.subr.bf16.mxu0 0
    %435 = vmatpush1.bf16.msra.mxu0 %v421
    %436 = vmatprep.subr.bf16.mxu0 0
    %437 = vmatpush1.bf16.msra.mxu0 %v422
    %438 = vmatprep.subr.bf16.mxu0 0
    %439 = vmatpush1.bf16.msra.mxu0 %v423
    %440 = vmatprep.subr.bf16.mxu0 0
    %441 = vmatpush1.bf16.msra.mxu0 0
    %442 = vmatprep.subr.bf16.mxu0 0
    %443 = vmatpush1.bf16.msra.mxu0 0
    %444 = vmatprep.subr.bf16.mxu0 0
    %445 = vmatpush1.bf16.msra.mxu0 0
    %446 = vmatprep.subr.bf16.mxu0 0
    %447 = vmatpush1.bf16.msra.mxu0 0
    %448 = vmatprep.subr.bf16.mxu0 0
    %449 = vmatpush1.bf16.msra.mxu0 0
    %450 = vmatprep.subr.bf16.mxu0 0
    %451 = vmatpush1.bf16.msra.mxu0 0
    %452 = vmatprep.subr.bf16.mxu0 0
    %453 = vmatpush1.bf16.msra.mxu0 0
    %454 = vmatprep.subr.bf16.mxu0 0
    %455 = vmatpush1.bf16.msra.mxu0 0
    %456 = vmatprep.subr.bf16.mxu0 0
    %457 = vmatpush1.bf16.msra.mxu0 0
    %458 = vmatprep.subr.bf16.mxu0 0
    %459 = vmatpush1.bf16.msra.mxu0 0
    %460 = vmatprep.subr.bf16.mxu0 0
    %461 = vmatpush1.bf16.msra.mxu0 0
    %462 = vmatprep.subr.bf16.mxu0 0
    %463 = vmatpush1.bf16.msra.mxu0 0
    %464 = vmatprep.mubr.bf16.mxu0 0
    %465 = vmatmul.mubr.bf16.gmra.mrb[0].mxu0 %v430
    %v466 = vpop.f32.mrb[0].mxu0
    %v467 = vadd.f32 %v402, %v466
    %v468 = vpop.f32.mrb[0].mxu0
    %v469 = vpop.f32.mrb[0].mxu0
    %v470 = vpop.f32.mrb[0].mxu0
    %471 = vdwg.mxu0
    %v472 = vmax.f32 %v467, 0.0
    %v473 = vld [vmem:[%s11] sm:$0x1]
    %v475 = vlaneseq
    %v476 = vshrl.u32 %v475, 7
    %v477 = vsub.s32 0, %v476
    %v478 = vrot.slane %v473, %v477
    %v480 = vmul.f32 %v472, %v478
    %vm481 = vcmask 257024
    %v482 = vsel %vm481, %v480, 0.0
    %483 = vadd.xlane.f32.xlu0 %v482
    %v484 = vpop.xlane.xlu0 %483
    %486 = vrot.lane.b32.xlu0 %v480, 96
    %v487 = vpop.permute.xlu0 %486
    %v489 = vsel %vm481, %v487, 0.0
    %490 = vadd.xlane.f32.xlu0 %v489
    %v491 = vpop.xlane.xlu0 %490
    %vm492 = vcmask 7168
    %v493 = vsel %vm492, %v484, %v491
    %v494 = vld [vmem:[%s12] sm:$0x1]
    %v496 = vlaneseq
    %v497 = vshrl.u32 %v496, 7
    %v498 = vsub.s32 0, %v497
    %v499 = vrot.slane %v494, %v498
    %v501 = vadd.f32 %v493, %v499
    %vm502 = vcmask 11264
    %503 = vst.msk [vmem:[%s13] sm:$0xf] %vm502, %v501
    // Predicated region
    $region58: #{tpu_custom_call.1} parent=1 // pred_check
      _
    $region59: #{tpu_custom_call.1} parent=1 // pred_check_branch
      %505 = sbr.rel (0) target = $region61
    $region60: #{tpu_custom_call.1} parent=1 // pred_region
      _
    $region61: #{tpu_custom_call.1} parent=1 // pred_fallthru
      _
    // Predicated region
    $region62: #{tpu_custom_call.1} parent=1 // pred_check
      _
    $region63: #{tpu_custom_call.1} parent=1 // pred_check_branch
      %507 = sbr.rel (0) target = $region65
    $region64: #{tpu_custom_call.1} parent=1 // pred_region
      _
    $region65: #{tpu_custom_call.1} parent=1 // pred_fallthru
      _
    %508 = vsyncpa [#allocation3], 1

</llo_original>
